<compile_context>
chip_gen: v7x
topology: tpu7x:2x2x1
jax: 0.10.0
libtpu: 0.0.40
codegen_flags: <defaults>
</compile_context>

<pallas_src>
import functools

import jax
import jax.numpy as jnp
from jax.experimental import pallas as pl
from jax.experimental.pallas import tpu as pltpu

EPS = 1e-5
# 32 MiB scoped VMEM is safe on every generation (v5e/v6e: 128 MiB phys, v7x: 64 MiB phys).
VMEM_LIMIT = 32 * 1024 * 1024


# ---------------------------------------------------------------------------
# Small helpers
# ---------------------------------------------------------------------------

def _round_up(x, m):
    return ((x + m - 1) // m) * m


def _seg_offsets(cs):
    offs = [0]
    for c in cs:
        offs.append(offs[-1] + c)
    return offs


def _bn_scale_shift(bn):
    inv = bn["gamma"] * jax.lax.rsqrt(bn["var"] + EPS)
    scale = inv
    shift = bn["beta"] - bn["mean"] * inv
    return (scale.reshape(1, -1).astype(jnp.float32),
            shift.reshape(1, -1).astype(jnp.float32))


# ---------------------------------------------------------------------------
# Kernel A: fused _DenseLayer  (BN -> ReLU -> 1x1 conv -> BN -> ReLU -> 3x3 conv)
# ---------------------------------------------------------------------------

def _dense_layer_kernel(*refs, S, H, W, mid):
    """One grid step == one batch image.

    refs layout:
      refs[0:S]      x_s     (1, H*W, C_s)  f32   input segments (implicit torch.cat)
      refs[S:2S]     sc1_s   (1, C_s)       f32   BN1 scale per segment
      refs[2S:3S]    sh1_s   (1, C_s)       f32   BN1 shift per segment
      refs[3S:4S]    w1_s    (C_s, mid)     bf16  1x1 weight rows per segment
      refs[4S+0..2]  sc2, sh2 (1, mid) f32 ; w2 (9*mid, G) bf16
      refs[4S+3]     o_ref   (1, H*W, G)    f32   output block
      refs[4S+4]     pad_ref (H+2, W+2, mid) f32  VMEM scratch (zero-padded activation)
    """
    HW = H * W
    xs = refs[0:S]
    sc1 = refs[S:2 * S]
    sh1 = refs[2 * S:3 * S]
    w1 = refs[3 * S:4 * S]
    sc2, sh2, w2, o_ref, pad_ref = refs[4 * S:4 * S + 5]

    # BN1 -> ReLU -> 1x1 conv, accumulated over segments (== conv on the concatenation).
    # Bottleneck never leaves VMEM.
    bot = jnp.zeros((HW, mid), jnp.float32)
    for s in range(S):
        a = jnp.maximum(xs[s][0] * sc1[s][...] + sh1[s][...], 0.0)
        bot = bot + jnp.dot(a.astype(jnp.bfloat16), w1[s][...],
                            preferred_element_type=jnp.float32)

    # BN2 -> ReLU, written once into a zero-padded scratch (implicit 3x3 zero padding).
    act2 = jnp.maximum(bot * sc2[...] + sh2[...], 0.0)
    pad_ref[...] = jnp.zeros(pad_ref.shape, pad_ref.dtype)
    pad_ref[1:H + 1, 1:W + 1, :] = act2.reshape(H, W, mid)

    # im2col from 9 static slices of the padded scratch -> ONE K = 9*mid matmul.
    cols = [pad_ref[kh:kh + H, kw:kw + W, :] for kh in range(3) for kw in range(3)]
    col = jnp.concatenate(cols, axis=-1).reshape(HW, 9 * mid).astype(jnp.bfloat16)
    o_ref[0] = jnp.dot(col, w2[...], preferred_element_type=jnp.float32)


def pallas_dense_layer(xs, lp):
    """xs: list of NHWC f32 feature maps (the implicit torch.cat inputs)."""
    N, H, W, _ = xs[0].shape
    HW = H * W
    S = len(xs)
    Cs = [int(a.shape[-1]) for a in xs]
    offs = _seg_offsets(Cs)
    mid = int(lp["w1"].shape[-1])
    G = int(lp["w2"].shape[-1])

    sc1, sh1 = _bn_scale_shift(lp["bn1"])
    sc2, sh2 = _bn_scale_shift(lp["bn2"])
    w1 = lp["w1"].astype(jnp.bfloat16)
    w2 = lp["w2"].reshape(9 * mid, G).astype(jnp.bfloat16)   # (kh, kw, cin) row-major

    x_flat = [a.reshape(N, HW, -1) for a in xs]
    sc1_s = [sc1[:, offs[s]:offs[s + 1]] for s in range(S)]
    sh1_s = [sh1[:, offs[s]:offs[s + 1]] for s in range(S)]
    w1_s = [w1[offs[s]:offs[s + 1], :] for s in range(S)]

    in_specs = (
        [pl.BlockSpec((1, HW, c), lambda n: (n, 0, 0)) for c in Cs]
        + [pl.BlockSpec((1, c), lambda n: (0, 0)) for c in Cs]
        + [pl.BlockSpec((1, c), lambda n: (0, 0)) for c in Cs]
        + [pl.BlockSpec((c, mid), lambda n: (0, 0)) for c in Cs]
        + [pl.BlockSpec((1, mid), lambda n: (0, 0)),
           pl.BlockSpec((1, mid), lambda n: (0, 0)),
           pl.BlockSpec((9 * mid, G), lambda n: (0, 0))])

    kern = functools.partial(_dense_layer_kernel, S=S, H=H, W=W, mid=mid)
    out = pl.pallas_call(
        kern,
        out_shape=jax.ShapeDtypeStruct((N, HW, G), jnp.float32),
        grid=(N,),
        in_specs=in_specs,
        out_specs=pl.BlockSpec((1, HW, G), lambda n: (n, 0, 0)),
        scratch_shapes=[pltpu.VMEM((H + 2, W + 2, mid), jnp.float32)],
        compiler_params=pltpu.CompilerParams(
            dimension_semantics=("parallel",),
            vmem_limit_bytes=VMEM_LIMIT),
    )(*x_flat, *sc1_s, *sh1_s, *w1_s, sc2, sh2, w2)
    return out.reshape(N, H, W, G)


# ---------------------------------------------------------------------------
# Kernel B: fused multi-head BN -> ReLU -> 1x1 conv (adapters ahead [+ skip])
# ---------------------------------------------------------------------------

def _multihead_1x1_kernel(*refs, S, NH):
    """NH adapter heads sharing the same multi-segment input rows.

    refs layout:
      refs[0:S]                     x_s (tm, C_s) f32
      refs[S : S+3*S*NH]            per (head, segment): scale (1,C_s) f32,
                                    shift (1,C_s) f32, weight (C_s, Cout) bf16
      refs[S+3*S*NH : +NH]          o_h (tm, Cout) f32
    """
    xs = refs[0:S]
    params = refs[S:S + 3 * S * NH]
    outs = refs[S + 3 * S * NH:S + 3 * S * NH + NH]

    xv = [xs[s][...] for s in range(S)]   # single VMEM load per segment, reused by heads
    for h in range(NH):
        acc = None
        for s in range(S):
            base = (h * S + s) * 3
            sc, sh, w = params[base], params[base + 1], params[base + 2]
            a = jnp.maximum(xv[s] * sc[...] + sh[...], 0.0)
            d = jnp.dot(a.astype(jnp.bfloat16), w[...],
                        preferred_element_type=jnp.float32)
            acc = d if acc is None else acc + d
        outs[h][...] = acc


def _pick_row_tile(M, row_bytes, target_bytes=2 * 1024 * 1024, max_tm=2048):
    # ~2 MiB of input rows per block; with double buffering + tiny weights this stays
    # far below the 32 MiB scoped-VMEM limit on v5e/v6e/v7x.
    tm = max(8, min(max_tm, target_bytes // max(row_bytes, 1)))
    tm = max(8, (tm // 8) * 8)
    if M <= tm:
        tm = _round_up(M, 8)
    return tm, _round_up(M, tm)


def pallas_adapters_1x1(xs, heads):
    """Fused adapters over the shared feature list `xs` (one output per head)."""
    N, H, W, _ = xs[0].shape
    M = N * H * W
    S = len(xs)
    NH = len(heads)
    Cs = [int(a.shape[-1]) for a in xs]
    offs = _seg_offsets(Cs)
    out_c = int(heads[0]["w"].shape[-1])

    x_flat = [a.reshape(M, -1) for a in xs]
    tm, M_pad = _pick_row_tile(M, sum(Cs) * 4)
    if M_pad != M:
        x_flat = [jnp.pad(a, ((0, M_pad - M), (0, 0))) for a in x_flat]

    head_params = []
    for hd in heads:
        sc, sh = _bn_scale_shift(hd["bn"])
        wbf = hd["w"].astype(jnp.bfloat16)
        for s in range(S):
            c0, c1 = offs[s], offs[s + 1]
            head_params += [sc[:, c0:c1], sh[:, c0:c1], wbf[c0:c1, :]]

    in_specs = [pl.BlockSpec((tm, c), lambda i: (i, 0)) for c in Cs]
    for _ in range(NH):
        for c in Cs:
            in_specs += [pl.BlockSpec((1, c), lambda i: (0, 0)),
                         pl.BlockSpec((1, c), lambda i: (0, 0)),
                         pl.BlockSpec((c, out_c), lambda i: (0, 0))]

    kern = functools.partial(_multihead_1x1_kernel, S=S, NH=NH)
    outs = pl.pallas_call(
        kern,
        out_shape=[jax.ShapeDtypeStruct((M_pad, out_c), jnp.float32)
                   for _ in range(NH)],
        grid=(M_pad // tm,),
        in_specs=in_specs,
        out_specs=[pl.BlockSpec((tm, out_c), lambda i: (i, 0)) for _ in range(NH)],
        compiler_params=pltpu.CompilerParams(
            dimension_semantics=("parallel",),
            vmem_limit_bytes=VMEM_LIMIT),
    )(*x_flat, *head_params)
    return [o[:M].reshape(N, H, W, out_c) for o in outs]


# ---------------------------------------------------------------------------
# Pure-JAX reference (correctness check only)
# ---------------------------------------------------------------------------

def ref_bn_relu_conv1x1(x, bn, w):
    scale, shift = _bn_scale_shift(bn)
    act = jnp.maximum(x * scale.reshape(1, 1, 1, -1) + shift.reshape(1, 1, 1, -1), 0.0)
    return jnp.einsum("nhwc,co->nhwo", act, w)


def ref_bn_relu_conv3x3(x, bn, w):
    scale, shift = _bn_scale_shift(bn)
    act = jnp.maximum(x * scale.reshape(1, 1, 1, -1) + shift.reshape(1, 1, 1, -1), 0.0)
    return jax.lax.conv_general_dilated(
        act, w, window_strides=(1, 1), padding=((1, 1), (1, 1)),
        dimension_numbers=("NHWC", "HWIO", "NHWC"))


# ---------------------------------------------------------------------------
# Deterministic parameter init (mirrors _DenseBlock.__init__ shapes)
# ---------------------------------------------------------------------------

def _make_bn(key, c):
    k1, k2, k3, k4 = jax.random.split(key, 4)
    return dict(
        gamma=0.5 + jax.random.uniform(k1, (c,), jnp.float32),
        beta=0.1 * jax.random.normal(k2, (c,), jnp.float32),
        mean=0.1 * jax.random.normal(k3, (c,), jnp.float32),
        var=0.5 + jax.random.uniform(k4, (c,), jnp.float32),
    )


def init_dense_block(key, in_num, growth_rate, neck_size, layer_num, max_link,
                     requires_skip=True, is_up=False):
    max_in_num = in_num + max_link * growth_rate
    adapter_out = in_num // 2 if is_up else in_num
    keys = iter(jax.random.split(key, 8 * layer_num + 4))
    layers, ahead, skip = [], [], []
    for i in range(layer_num):
        cin = in_num + i * growth_rate if i < max_link else max_in_num
        mid = neck_size * growth_rate
        layers.append(dict(
            bn1=_make_bn(next(keys), cin),
            w1=0.05 * jax.random.normal(next(keys), (cin, mid), jnp.float32),
            bn2=_make_bn(next(keys), mid),
            w2=0.05 * jax.random.normal(next(keys), (3, 3, mid, growth_rate), jnp.float32),
        ))
    for i in range(layer_num):
        a_in = in_num + (i + 1) * growth_rate if i < max_link else max_in_num + growth_rate
        ahead.append(dict(
            bn=_make_bn(next(keys), a_in),
            w=0.05 * jax.random.normal(next(keys), (a_in, adapter_out), jnp.float32)))
        if requires_skip:
            skip.append(dict(
                bn=_make_bn(next(keys), a_in),
                w=0.05 * jax.random.normal(next(keys), (a_in, adapter_out), jnp.float32)))
    return dict(layers=layers, adapters_ahead=ahead, adapters_skip=skip,
                max_link=max_link, requires_skip=requires_skip)


# ---------------------------------------------------------------------------
# _DenseBlock.forward(x, i) semantics (saved_features passed explicitly)
# ---------------------------------------------------------------------------

def _update_saved(params, saved_features, out, i):
    new_saved = list(saved_features)
    if i < params["max_link"]:
        new_saved.append(out)
    elif len(new_saved) != 0:
        new_saved.pop(0)
        new_saved.append(out)
    return new_saved


def dense_block_forward_pallas(params, x, i, saved_features):
    if i == 0:
        saved_features = []
    xs = [x] + list(saved_features)

    out = pallas_dense_layer(xs, params["layers"][i])       # fused 1x1 + 3x3 layer
    new_saved = _update_saved(params, saved_features, out, i)

    xs.append(out)
    heads = [params["adapters_ahead"][i]]
    if params["requires_skip"]:
        heads.append(params["adapters_skip"][i])
    adapter_outs = pallas_adapters_1x1(xs, heads)            # fused ahead (+ skip)

    if params["requires_skip"]:
        return (adapter_outs[0], adapter_outs[1]), new_saved
    return adapter_outs[0], new_saved


def dense_block_forward_ref(params, x, i, saved_features):
    if i == 0:
        saved_features = []
    xs = [x] + list(saved_features)
    lp = params["layers"][i]
    cat = jnp.concatenate(xs, axis=-1) if len(xs) > 1 else xs[0]
    bottleneck = ref_bn_relu_conv1x1(cat, lp["bn1"], lp["w1"])
    out = ref_bn_relu_conv3x3(bottleneck, lp["bn2"], lp["w2"])
    new_saved = _update_saved(params, saved_features, out, i)

    xs.append(out)
    cat2 = jnp.concatenate(xs, axis=-1)
    ap = params["adapters_ahead"][i]
    out_ahead = ref_bn_relu_conv1x1(cat2, ap["bn"], ap["w"])
    if params["requires_skip"]:
        sp = params["adapters_skip"][i]
        out_skip = ref_bn_relu_conv1x1(cat2, sp["bn"], sp["w"])
        return (out_ahead, out_skip), new_saved
    return out_ahead, new_saved


# ---------------------------------------------------------------------------
# Main
# ---------------------------------------------------------------------------

if __name__ == "__main__":
    key = jax.random.PRNGKey(0)
    kp, kx = jax.random.split(key)

    # small shapes consistent with the module
    N, H, W = 2, 16, 16
    in_num, growth_rate, neck_size, layer_num, max_link = 8, 4, 2, 2, 1

    params = init_dense_block(kp, in_num, growth_rate, neck_size,
                              layer_num, max_link, requires_skip=True, is_up=False)

    # PyTorch-style NCHW input, transposed to NHWC for the kernels.
    x_nchw = jax.random.normal(kx, (N, in_num, H, W), jnp.float32)
    x = jnp.transpose(x_nchw, (0, 2, 3, 1))

    saved_p, saved_r = [], []
    xp, xr = x, x
    for i in range(layer_num):
        (ahead_p, skip_p), saved_p = dense_block_forward_pallas(params, xp, i, saved_p)
        (ahead_r, skip_r), saved_r = dense_block_forward_ref(params, xr, i, saved_r)

        jax.block_until_ready(ahead_p)
        jax.block_until_ready(skip_p)

        assert ahead_p.shape == (N, H, W, in_num) and skip_p.shape == (N, H, W, in_num)
        # bf16 matmul inputs (f32 accumulation) -> compare against the f32 reference
        # with a bf16-appropriate tolerance.
        assert bool(jnp.allclose(ahead_p, ahead_r, atol=1e-2, rtol=3e-2)), (
            "ahead mismatch at layer %d" % i)
        assert bool(jnp.allclose(skip_p, skip_r, atol=1e-2, rtol=3e-2)), (
            "skip mismatch at layer %d" % i)

        xp, xr = ahead_p, ahead_r

    print("KERNEL_OK")
</pallas_src>

<mosaic_0001>
module attributes {stable_mosaic.version = 11 : i64} {
  func.func @_dense_layer_kernel(%arg0: i32, %arg1: memref<1x256x8xf32, #tpu.memory_space<vmem>>, %arg2: memref<1x8xf32, #tpu.memory_space<vmem>>, %arg3: memref<1x8xf32, #tpu.memory_space<vmem>>, %arg4: memref<8x8xbf16, #tpu.memory_space<vmem>>, %arg5: memref<1x8xf32, #tpu.memory_space<vmem>>, %arg6: memref<1x8xf32, #tpu.memory_space<vmem>>, %arg7: memref<72x4xbf16, #tpu.memory_space<vmem>>, %arg8: memref<1x256x4xf32, #tpu.memory_space<vmem>>, %arg9: memref<18x18x8xf32, #tpu.memory_space<vmem>>) attributes {dimension_semantics = [#tpu.dimension_semantics<parallel>], iteration_bounds = array<i64: 2>, scalar_prefetch = 0 : i64, scratch_operands = 1 : i64, tpu.core_type = #tpu.core_type<tc>, window_params = [{transform_indices = @transform_0, window_bounds = array<i64: 1, 256, 8>}, {pipeline_mode = #tpu.pipeline_mode<synchronous>, transform_indices = @transform_1, window_bounds = array<i64: 1, 8>}, {pipeline_mode = #tpu.pipeline_mode<synchronous>, transform_indices = @transform_2, window_bounds = array<i64: 1, 8>}, {pipeline_mode = #tpu.pipeline_mode<synchronous>, transform_indices = @transform_3, window_bounds = array<i64: 8, 8>}, {pipeline_mode = #tpu.pipeline_mode<synchronous>, transform_indices = @transform_4, window_bounds = array<i64: 1, 8>}, {pipeline_mode = #tpu.pipeline_mode<synchronous>, transform_indices = @transform_5, window_bounds = array<i64: 1, 8>}, {pipeline_mode = #tpu.pipeline_mode<synchronous>, transform_indices = @transform_6, window_bounds = array<i64: 72, 4>}, {transform_indices = @transform_7, window_bounds = array<i64: 1, 256, 4>}]} {
    %cst = arith.constant 0.000000e+00 : f32
    %0 = vector.broadcast %cst : f32 to vector<256x8xf32>
    %c0 = arith.constant 0 : index
    %c0_0 = arith.constant 0 : index
    %c0_1 = arith.constant 0 : index
    %1 = vector.load %arg1[%c0, %c0_0, %c0_1] : memref<1x256x8xf32, #tpu.memory_space<vmem>>, vector<1x256x8xf32>
    %2 = vector.shape_cast %1 : vector<1x256x8xf32> to vector<256x8xf32>
    %c0_2 = arith.constant 0 : index
    %c0_3 = arith.constant 0 : index
    %3 = vector.load %arg2[%c0_2, %c0_3] : memref<1x8xf32, #tpu.memory_space<vmem>>, vector<1x8xf32>
    %4 = vector.broadcast %3 : vector<1x8xf32> to vector<256x8xf32>
    %5 = arith.mulf %2, %4 : vector<256x8xf32>
    %c0_4 = arith.constant 0 : index
    %c0_5 = arith.constant 0 : index
    %6 = vector.load %arg3[%c0_4, %c0_5] : memref<1x8xf32, #tpu.memory_space<vmem>>, vector<1x8xf32>
    %7 = vector.broadcast %6 : vector<1x8xf32> to vector<256x8xf32>
    %8 = arith.addf %5, %7 : vector<256x8xf32>
    %cst_6 = arith.constant 0.000000e+00 : f32
    %9 = vector.broadcast %cst_6 : f32 to vector<256x8xf32>
    %10 = arith.maximumf %8, %9 : vector<256x8xf32>
    %11 = arith.truncf %10 : vector<256x8xf32> to vector<256x8xbf16>
    %c0_7 = arith.constant 0 : index
    %c0_8 = arith.constant 0 : index
    %12 = vector.load %arg4[%c0_7, %c0_8] : memref<8x8xbf16, #tpu.memory_space<vmem>>, vector<8x8xbf16>
    %cst_9 = arith.constant dense<0.000000e+00> : vector<256x8xf32>
    %13 = tpu.matmul %11, %12, %cst_9 {dimension_numbers = #tpu.dot_dimension_numbers<[1], [0], [0], [1], [0, 0, 1, 1], [], []>} : vector<256x8xbf16>, vector<8x8xbf16>, vector<256x8xf32> -> vector<256x8xf32>
    %14 = arith.addf %0, %13 : vector<256x8xf32>
    %c0_10 = arith.constant 0 : index
    %c0_11 = arith.constant 0 : index
    %15 = vector.load %arg5[%c0_10, %c0_11] : memref<1x8xf32, #tpu.memory_space<vmem>>, vector<1x8xf32>
    %16 = vector.broadcast %15 : vector<1x8xf32> to vector<256x8xf32>
    %17 = arith.mulf %14, %16 : vector<256x8xf32>
    %c0_12 = arith.constant 0 : index
    %c0_13 = arith.constant 0 : index
    %18 = vector.load %arg6[%c0_12, %c0_13] : memref<1x8xf32, #tpu.memory_space<vmem>>, vector<1x8xf32>
    %19 = vector.broadcast %18 : vector<1x8xf32> to vector<256x8xf32>
    %20 = arith.addf %17, %19 : vector<256x8xf32>
    %cst_14 = arith.constant 0.000000e+00 : f32
    %21 = vector.broadcast %cst_14 : f32 to vector<256x8xf32>
    %22 = arith.maximumf %20, %21 : vector<256x8xf32>
    %cst_15 = arith.constant 0.000000e+00 : f32
    %23 = vector.broadcast %cst_15 : f32 to vector<18x18x8xf32>
    %c0_16 = arith.constant 0 : index
    %c0_17 = arith.constant 0 : index
    %c0_18 = arith.constant 0 : index
    %24 = vector.load %arg9[%c0_16, %c0_17, %c0_18] : memref<18x18x8xf32, #tpu.memory_space<vmem>>, vector<18x18x8xf32>
    tpu.vector_store %arg9[%c0_16, %c0_17, %c0_18], %23 {strides = array<i32>} : memref<18x18x8xf32, #tpu.memory_space<vmem>>, vector<18x18x8xf32>,
    %25 = vector.shape_cast %22 : vector<256x8xf32> to vector<16x16x8xf32>
    %c1 = arith.constant 1 : index
    %c1_19 = arith.constant 1 : index
    %c0_20 = arith.constant 0 : index
    %26 = vector.load %arg9[%c1, %c1_19, %c0_20] : memref<18x18x8xf32, #tpu.memory_space<vmem>>, vector<16x16x8xf32>
    tpu.vector_store %arg9[%c1, %c1_19, %c0_20], %25 {strides = array<i32>} : memref<18x18x8xf32, #tpu.memory_space<vmem>>, vector<16x16x8xf32>,
    %c0_21 = arith.constant 0 : index
    %c0_22 = arith.constant 0 : index
    %c0_23 = arith.constant 0 : index
    %27 = vector.load %arg9[%c0_21, %c0_22, %c0_23] : memref<18x18x8xf32, #tpu.memory_space<vmem>>, vector<16x16x8xf32>
    %c0_24 = arith.constant 0 : index
    %c1_25 = arith.constant 1 : index
    %c0_26 = arith.constant 0 : index
    %28 = vector.load %arg9[%c0_24, %c1_25, %c0_26] : memref<18x18x8xf32, #tpu.memory_space<vmem>>, vector<16x16x8xf32>
    %c0_27 = arith.constant 0 : index
    %c2 = arith.constant 2 : index
    %c0_28 = arith.constant 0 : index
    %29 = vector.load %arg9[%c0_27, %c2, %c0_28] : memref<18x18x8xf32, #tpu.memory_space<vmem>>, vector<16x16x8xf32>
    %c1_29 = arith.constant 1 : index
    %c0_30 = arith.constant 0 : index
    %c0_31 = arith.constant 0 : index
    %30 = vector.load %arg9[%c1_29, %c0_30, %c0_31] : memref<18x18x8xf32, #tpu.memory_space<vmem>>, vector<16x16x8xf32>
    %c1_32 = arith.constant 1 : index
    %c1_33 = arith.constant 1 : index
    %c0_34 = arith.constant 0 : index
    %31 = vector.load %arg9[%c1_32, %c1_33, %c0_34] : memref<18x18x8xf32, #tpu.memory_space<vmem>>, vector<16x16x8xf32>
    %c1_35 = arith.constant 1 : index
    %c2_36 = arith.constant 2 : index
    %c0_37 = arith.constant 0 : index
    %32 = vector.load %arg9[%c1_35, %c2_36, %c0_37] : memref<18x18x8xf32, #tpu.memory_space<vmem>>, vector<16x16x8xf32>
    %c2_38 = arith.constant 2 : index
    %c0_39 = arith.constant 0 : index
    %c0_40 = arith.constant 0 : index
    %33 = vector.load %arg9[%c2_38, %c0_39, %c0_40] : memref<18x18x8xf32, #tpu.memory_space<vmem>>, vector<16x16x8xf32>
    %c2_41 = arith.constant 2 : index
    %c1_42 = arith.constant 1 : index
    %c0_43 = arith.constant 0 : index
    %34 = vector.load %arg9[%c2_41, %c1_42, %c0_43] : memref<18x18x8xf32, #tpu.memory_space<vmem>>, vector<16x16x8xf32>
    %c2_44 = arith.constant 2 : index
    %c2_45 = arith.constant 2 : index
    %c0_46 = arith.constant 0 : index
    %35 = vector.load %arg9[%c2_44, %c2_45, %c0_46] : memref<18x18x8xf32, #tpu.memory_space<vmem>>, vector<16x16x8xf32>
    %36 = tpu.concatenate %27, %28, %29, %30, %31, %32, %33, %34, %35 in 2 : vector<16x16x8xf32>, vector<16x16x8xf32>, vector<16x16x8xf32>, vector<16x16x8xf32>, vector<16x16x8xf32>, vector<16x16x8xf32>, vector<16x16x8xf32>, vector<16x16x8xf32>, vector<16x16x8xf32> -> vector<16x16x72xf32>
    %37 = vector.shape_cast %36 : vector<16x16x72xf32> to vector<256x72xf32>
    %38 = arith.truncf %37 : vector<256x72xf32> to vector<256x72xbf16>
    %c0_47 = arith.constant 0 : index
    %c0_48 = arith.constant 0 : index
    %39 = vector.load %arg7[%c0_47, %c0_48] : memref<72x4xbf16, #tpu.memory_space<vmem>>, vector<72x4xbf16>
    %cst_49 = arith.constant dense<0.000000e+00> : vector<256x4xf32>
    %40 = tpu.matmul %38, %39, %cst_49 {dimension_numbers = #tpu.dot_dimension_numbers<[1], [0], [0], [1], [0, 0, 1, 1], [], []>} : vector<256x72xbf16>, vector<72x4xbf16>, vector<256x4xf32> -> vector<256x4xf32>
    %c0_50 = arith.constant 0 : index
    %c0_51 = arith.constant 0 : index
    %c0_52 = arith.constant 0 : index
    %41 = vector.load %arg8[%c0_50, %c0_51, %c0_52] : memref<1x256x4xf32, #tpu.memory_space<vmem>>, vector<1x256x4xf32>
    %42 = vector.shape_cast %41 : vector<1x256x4xf32> to vector<256x4xf32>
    %43 = vector.shape_cast %40 : vector<256x4xf32> to vector<1x256x4xf32>
    tpu.vector_store %arg8[%c0_50, %c0_51, %c0_52], %43 {strides = array<i32>} : memref<1x256x4xf32, #tpu.memory_space<vmem>>, vector<1x256x4xf32>,
    return
  }
  func.func @transform_0(%arg0: i32) -> (i32, i32, i32) {
    %c0_i32 = arith.constant 0 : i32
    %c0_i32_0 = arith.constant 0 : i32
    %c0_i32_1 = arith.constant 0 : i32
    return %arg0, %c0_i32, %c0_i32_0 : i32, i32, i32
  }
  func.func @transform_1(%arg0: i32) -> (i32, i32) {
    %c0_i32 = arith.constant 0 : i32
    %c0_i32_0 = arith.constant 0 : i32
    %c0_i32_1 = arith.constant 0 : i32
    return %c0_i32, %c0_i32_0 : i32, i32
  }
  func.func @transform_2(%arg0: i32) -> (i32, i32) {
    %c0_i32 = arith.constant 0 : i32
    %c0_i32_0 = arith.constant 0 : i32
    %c0_i32_1 = arith.constant 0 : i32
    return %c0_i32, %c0_i32_0 : i32, i32
  }
  func.func @transform_3(%arg0: i32) -> (i32, i32) {
    %c0_i32 = arith.constant 0 : i32
    %c0_i32_0 = arith.constant 0 : i32
    %c0_i32_1 = arith.constant 0 : i32
    return %c0_i32, %c0_i32_0 : i32, i32
  }
  func.func @transform_4(%arg0: i32) -> (i32, i32) {
    %c0_i32 = arith.constant 0 : i32
    %c0_i32_0 = arith.constant 0 : i32
    %c0_i32_1 = arith.constant 0 : i32
    return %c0_i32, %c0_i32_0 : i32, i32
  }
  func.func @transform_5(%arg0: i32) -> (i32, i32) {
    %c0_i32 = arith.constant 0 : i32
    %c0_i32_0 = arith.constant 0 : i32
    %c0_i32_1 = arith.constant 0 : i32
    return %c0_i32, %c0_i32_0 : i32, i32
  }
  func.func @transform_6(%arg0: i32) -> (i32, i32) {
    %c0_i32 = arith.constant 0 : i32
    %c0_i32_0 = arith.constant 0 : i32
    %c0_i32_1 = arith.constant 0 : i32
    return %c0_i32, %c0_i32_0 : i32, i32
  }
  func.func @transform_7(%arg0: i32) -> (i32, i32, i32) {
    %c0_i32 = arith.constant 0 : i32
    %c0_i32_0 = arith.constant 0 : i32
    %c0_i32_1 = arith.constant 0 : i32
    return %arg0, %c0_i32, %c0_i32_0 : i32, i32, i32
  }
}

</mosaic_0001>

<llo_original>
// kernel: tpu_custom_call.1
$region0: #{tpu_custom_call.1}
  #allocation0 [shape = 'u32[]', space=smem, size = 0x4, offset = 0x4, fixed_abs, tag = 'smem constant byte address 0x4 - core index']
  #allocation1 [shape = 'u32[144,128]{1,0:T(1,128)}', space=vmem, size = 0x12000, scoped, tag = 'internal scratch']
  #allocation2 [shape = 'f32[18,18,8]{2,1,0:T(8,128)}', space=vmem, size = 0x36000, scoped, tag = 'scratch operand']
  %s0 = inlined_call_operand.vmem [shape: f32[2,256,8], index: 0, kind: input, shape index: {}]
  %s1 = inlined_call_operand.vmem [shape: f32[1,8], index: 1, kind: input, shape index: {}]
  %s2 = inlined_call_operand.vmem [shape: f32[1,8], index: 2, kind: input, shape index: {}]
  %s3 = inlined_call_operand.vmem [shape: bf16[8,8], index: 3, kind: input, shape index: {}]
  %s4 = inlined_call_operand.vmem [shape: f32[1,8], index: 4, kind: input, shape index: {}]
  %s5 = inlined_call_operand.vmem [shape: f32[1,8], index: 5, kind: input, shape index: {}]
  %s6 = inlined_call_operand.vmem [shape: bf16[72,4], index: 6, kind: input, shape index: {}]
  %s7 = inlined_call_operand.vmem [shape: f32[2,256,4], index: 7, kind: output, shape index: {}]
  %s8 = sld [smem:[#allocation0]]
  $region61: #{tpu_custom_call.1} parent=0
    _
  %s10 = ssub.s32 1, %s8
  %s11 = scalar_select 0, %s10, %s8
  loop: start=0, step=1, limit=4
  $region2: #{tpu_custom_call.1} parent=0 // loop_pre_header
    _
  $region3: #{tpu_custom_call.1} parent=0 // loop_header
    %s13 = sphi 0, %s17
    %p14 = scmp.ge.s32.totalorder %s13, 4
    %s23 = sphi 0, %s25
    %s26 = sphi 0, %s23
    %s27 = sphi 0, %s26
    %s43 = sphi 0, %s27
    %s47 = sphi 0, %s47
    %s49 = sphi 0, %s47
    %s50 = sphi 0, %s49
    %s64 = sphi 0, %s50
    %s68 = sphi 0, %s68
    %s70 = sphi 0, %s68
    %s71 = sphi 0, %s70
    %s85 = sphi 0, %s71
    %s89 = sphi 0, %s89
    %s91 = sphi 0, %s89
    %s92 = sphi 0, %s91
    %s106 = sphi 0, %s92
    %s110 = sphi 0, %s110
    %s112 = sphi 0, %s110
    %s113 = sphi 0, %s112
    %s127 = sphi 0, %s113
    %s131 = sphi 0, %s131
    %s133 = sphi 0, %s131
    %s134 = sphi 0, %s133
    %s148 = sphi 0, %s134
    %s152 = sphi 0, %s152
    %s154 = sphi 0, %s152
    %s155 = sphi 0, %s154
    %s169 = sphi 0, %s155
    %s175 = sphi 0, %s177
    %s178 = sphi 0, %s175
    %s179 = sphi 0, %s178
    %s195 = sphi 0, %s179
  $region4: #{tpu_custom_call.1} parent=0 // loop_header_branch
    %16 = sbr.rel (%p14) target = $region8
  $region5: #{tpu_custom_call.1} parent=0 // loop_body
    %s18 = ssub.s32 %s13, 1
    %s19 = ssub.s32 %s13, 2
    %s20 = sadd.s32 %s13, 1
    %s21 = ssub.s32 %s13, %s20
    %p22 = scmp.eq.s32.totalorder %s21, 0
    %s24 = sadd.s32 %s23, 1
    %s25 = scalar_select %p22, %s23, %s24
    %p28 = pneg %p22
    %p29 = scmp.eq.s32.totalorder %s13, 1
    %p30 = por %p28, %p29
    %p31 = scmp.ne.s32.totalorder %s23, %s26
    %p32 = scmp.eq.s32.totalorder %s13, 0
    %p33 = por %p31, %p32
    %p34 = scmp.ne.s32.totalorder %s23, %s26
    %p35 = scmp.eq.s32.totalorder %s18, 1
    %p36 = por %p34, %p35
    %p37 = scmp.ne.s32.totalorder %s26, %s27
    %p38 = scmp.eq.s32.totalorder %s18, 0
    %p39 = por %p37, %p38
    %p40 = scmp.ne.s32.totalorder %s26, %s27
    %p41 = scmp.eq.s32.totalorder %s19, 1
    %p42 = por %p40, %p41
    %p44 = scmp.ne.s32.totalorder %s27, %s43
    %p45 = scmp.eq.s32.totalorder %s19, 0
    %p46 = por %p44, %p45
    %s48 = sadd.s32 %s47, 1
    %p51 = scmp.eq.s32.totalorder %s13, 1
    %p52 = scmp.ne.s32.totalorder %s47, %s49
    %p53 = scmp.eq.s32.totalorder %s13, 0
    %p54 = por %p52, %p53
    %p55 = scmp.ne.s32.totalorder %s47, %s49
    %p56 = scmp.eq.s32.totalorder %s18, 1
    %p57 = por %p55, %p56
    %p58 = scmp.ne.s32.totalorder %s49, %s50
    %p59 = scmp.eq.s32.totalorder %s18, 0
    %p60 = por %p58, %p59
    %p61 = scmp.ne.s32.totalorder %s49, %s50
    %p62 = scmp.eq.s32.totalorder %s19, 1
    %p63 = por %p61, %p62
    %p65 = scmp.ne.s32.totalorder %s50, %s64
    %p66 = scmp.eq.s32.totalorder %s19, 0
    %p67 = por %p65, %p66
    %s69 = sadd.s32 %s68, 1
    %p72 = scmp.eq.s32.totalorder %s13, 1
    %p73 = scmp.ne.s32.totalorder %s68, %s70
    %p74 = scmp.eq.s32.totalorder %s13, 0
    %p75 = por %p73, %p74
    %p76 = scmp.ne.s32.totalorder %s68, %s70
    %p77 = scmp.eq.s32.totalorder %s18, 1
    %p78 = por %p76, %p77
    %p79 = scmp.ne.s32.totalorder %s70, %s71
    %p80 = scmp.eq.s32.totalorder %s18, 0
    %p81 = por %p79, %p80
    %p82 = scmp.ne.s32.totalorder %s70, %s71
    %p83 = scmp.eq.s32.totalorder %s19, 1
    %p84 = por %p82, %p83
    %p86 = scmp.ne.s32.totalorder %s71, %s85
    %p87 = scmp.eq.s32.totalorder %s19, 0
    %p88 = por %p86, %p87
    %s90 = sadd.s32 %s89, 1
    %p93 = scmp.eq.s32.totalorder %s13, 1
    %p94 = scmp.ne.s32.totalorder %s89, %s91
    %p95 = scmp.eq.s32.totalorder %s13, 0
    %p96 = por %p94, %p95
    %p97 = scmp.ne.s32.totalorder %s89, %s91
    %p98 = scmp.eq.s32.totalorder %s18, 1
    %p99 = por %p97, %p98
    %p100 = scmp.ne.s32.totalorder %s91, %s92
    %p101 = scmp.eq.s32.totalorder %s18, 0
    %p102 = por %p100, %p101
    %p103 = scmp.ne.s32.totalorder %s91, %s92
    %p104 = scmp.eq.s32.totalorder %s19, 1
    %p105 = por %p103, %p104
    %p107 = scmp.ne.s32.totalorder %s92, %s106
    %p108 = scmp.eq.s32.totalorder %s19, 0
    %p109 = por %p107, %p108
    %s111 = sadd.s32 %s110, 1
    %p114 = scmp.eq.s32.totalorder %s13, 1
    %p115 = scmp.ne.s32.totalorder %s110, %s112
    %p116 = scmp.eq.s32.totalorder %s13, 0
    %p117 = por %p115, %p116
    %p118 = scmp.ne.s32.totalorder %s110, %s112
    %p119 = scmp.eq.s32.totalorder %s18, 1
    %p120 = por %p118, %p119
    %p121 = scmp.ne.s32.totalorder %s112, %s113
    %p122 = scmp.eq.s32.totalorder %s18, 0
    %p123 = por %p121, %p122
    %p124 = scmp.ne.s32.totalorder %s112, %s113
    %p125 = scmp.eq.s32.totalorder %s19, 1
    %p126 = por %p124, %p125
    %p128 = scmp.ne.s32.totalorder %s113, %s127
    %p129 = scmp.eq.s32.totalorder %s19, 0
    %p130 = por %p128, %p129
    %s132 = sadd.s32 %s131, 1
    %p135 = scmp.eq.s32.totalorder %s13, 1
    %p136 = scmp.ne.s32.totalorder %s131, %s133
    %p137 = scmp.eq.s32.totalorder %s13, 0
    %p138 = por %p136, %p137
    %p139 = scmp.ne.s32.totalorder %s131, %s133
    %p140 = scmp.eq.s32.totalorder %s18, 1
    %p141 = por %p139, %p140
    %p142 = scmp.ne.s32.totalorder %s133, %s134
    %p143 = scmp.eq.s32.totalorder %s18, 0
    %p144 = por %p142, %p143
    %p145 = scmp.ne.s32.totalorder %s133, %s134
    %p146 = scmp.eq.s32.totalorder %s19, 1
    %p147 = por %p145, %p146
    %p149 = scmp.ne.s32.totalorder %s134, %s148
    %p150 = scmp.eq.s32.totalorder %s19, 0
    %p151 = por %p149, %p150
    %s153 = sadd.s32 %s152, 1
    %p156 = scmp.eq.s32.totalorder %s13, 1
    %p157 = scmp.ne.s32.totalorder %s152, %s154
    %p158 = scmp.eq.s32.totalorder %s13, 0
    %p159 = por %p157, %p158
    %p160 = scmp.ne.s32.totalorder %s152, %s154
    %p161 = scmp.eq.s32.totalorder %s18, 1
    %p162 = por %p160, %p161
    %p163 = scmp.ne.s32.totalorder %s154, %s155
    %p164 = scmp.eq.s32.totalorder %s18, 0
    %p165 = por %p163, %p164
    %p166 = scmp.ne.s32.totalorder %s154, %s155
    %p167 = scmp.eq.s32.totalorder %s19, 1
    %p168 = por %p166, %p167
    %p170 = scmp.ne.s32.totalorder %s155, %s169
    %p171 = scmp.eq.s32.totalorder %s19, 0
    %p172 = por %p170, %p171
    %s173 = ssub.s32 %s13, %s20
    %p174 = scmp.eq.s32.totalorder %s173, 0
    %s176 = sadd.s32 %s175, 1
    %s177 = scalar_select %p174, %s175, %s176
    %p180 = pneg %p174
    %p181 = scmp.eq.s32.totalorder %s13, 1
    %p182 = por %p180, %p181
    %p183 = scmp.ne.s32.totalorder %s175, %s178
    %p184 = scmp.eq.s32.totalorder %s13, 0
    %p185 = por %p183, %p184
    %p186 = scmp.ne.s32.totalorder %s175, %s178
    %p187 = scmp.eq.s32.totalorder %s18, 1
    %p188 = por %p186, %p187
    %p189 = scmp.ne.s32.totalorder %s178, %s179
    %p190 = scmp.eq.s32.totalorder %s18, 0
    %p191 = por %p189, %p190
    %p192 = scmp.ne.s32.totalorder %s178, %s179
    %p193 = scmp.eq.s32.totalorder %s19, 1
    %p194 = por %p192, %p193
    %p196 = scmp.ne.s32.totalorder %s179, %s195
    %p197 = scmp.eq.s32.totalorder %s19, 0
    %p198 = por %p196, %p197
    %p199 = scmp.le.s32.totalorder 1, %s13
    %p200 = scmp.lt.s32.totalorder %s13, 3
    %p201 = pnand %p199, %p200
    %p202 = pneg %p201
    // Predicated region
    $region9: #{tpu_custom_call.1} parent=5 // pred_check
      _
    $region10: #{tpu_custom_call.1} parent=5 // pred_check_branch
      %204 = sbr.rel (%p201) target = $region12
    $region11: #{tpu_custom_call.1} parent=5 // pred_region
      %s205 = ssub.s32 %s13, 1
      // Predicated region
      $region13: #{tpu_custom_call.1} parent=11 // pred_check
        %p206 = pneg %p60
      $region14: #{tpu_custom_call.1} parent=11 // pred_check_branch
        %208 = sbr.rel (%p206) target = $region16
      $region15: #{tpu_custom_call.1} parent=11 // pred_region
        _
      $region16: #{tpu_custom_call.1} parent=11 // pred_fallthru
        _
      // Predicated region
      $region17: #{tpu_custom_call.1} parent=11 // pred_check
        %p209 = pneg %p81
      $region18: #{tpu_custom_call.1} parent=11 // pred_check_branch
        %211 = sbr.rel (%p209) target = $region20
      $region19: #{tpu_custom_call.1} parent=11 // pred_region
        _
      $region20: #{tpu_custom_call.1} parent=11 // pred_fallthru
        _
      // Predicated region
      $region21: #{tpu_custom_call.1} parent=11 // pred_check
        %p212 = pneg %p102
      $region22: #{tpu_custom_call.1} parent=11 // pred_check_branch
        %214 = sbr.rel (%p212) target = $region24
      $region23: #{tpu_custom_call.1} parent=11 // pred_region
        _
      $region24: #{tpu_custom_call.1} parent=11 // pred_fallthru
        _
      // Predicated region
      $region25: #{tpu_custom_call.1} parent=11 // pred_check
        %p215 = pneg %p123
      $region26: #{tpu_custom_call.1} parent=11 // pred_check_branch
        %217 = sbr.rel (%p215) target = $region28
      $region27: #{tpu_custom_call.1} parent=11 // pred_region
        _
      $region28: #{tpu_custom_call.1} parent=11 // pred_fallthru
        _
      // Predicated region
      $region29: #{tpu_custom_call.1} parent=11 // pred_check
        %p218 = pneg %p144
      $region30: #{tpu_custom_call.1} parent=11 // pred_check_branch
        %220 = sbr.rel (%p218) target = $region32
      $region31: #{tpu_custom_call.1} parent=11 // pred_region
        _
      $region32: #{tpu_custom_call.1} parent=11 // pred_fallthru
        _
      // Predicated region
      $region33: #{tpu_custom_call.1} parent=11 // pred_check
        %p221 = pneg %p165
      $region34: #{tpu_custom_call.1} parent=11 // pred_check_branch
        %223 = sbr.rel (%p221) target = $region36
      $region35: #{tpu_custom_call.1} parent=11 // pred_region
        _
      $region36: #{tpu_custom_call.1} parent=11 // pred_fallthru
        _
    $region12: #{tpu_custom_call.1} parent=5 // pred_fallthru
      _
    %p224 = scmp.lt.s32.totalorder %s13, 2
    // Predicated region
    $region37: #{tpu_custom_call.1} parent=5 // pred_check
      %p225 = pneg %p224
    $region38: #{tpu_custom_call.1} parent=5 // pred_check_branch
      %227 = sbr.rel (%p225) target = $region40
    $region39: #{tpu_custom_call.1} parent=5 // pred_region
      // Predicated region
      $region41: #{tpu_custom_call.1} parent=39 // pred_check
        %p228 = pneg %p33
      $region42: #{tpu_custom_call.1} parent=39 // pred_check_branch
        %230 = sbr.rel (%p228) target = $region44
      $region43: #{tpu_custom_call.1} parent=39 // pred_region
        %p231 = scmp.lt.s32.totalorder %s13, 1
        %s232 = scalar_select %p231, %s13, 1
        %s233 = smul.addr %s232, 32
        %s234 = smul.addr %s233, 8
        %s235 = scalar_lea.vmem %s0, %s234
      $region44: #{tpu_custom_call.1} parent=39 // pred_fallthru
        _
    $region40: #{tpu_custom_call.1} parent=5 // pred_fallthru
      _
    %p236 = scmp.le.s32.totalorder 1, %s13
    %p237 = scmp.lt.s32.totalorder %s13, 3
    %p238 = pnand %p236, %p237
    %p239 = pneg %p238
    // Predicated region
    $region45: #{tpu_custom_call.1} parent=5 // pred_check
      _
    $region46: #{tpu_custom_call.1} parent=5 // pred_check_branch
      %241 = sbr.rel (%p238) target = $region48
    $region47: #{tpu_custom_call.1} parent=5 // pred_region
      %s242 = ssub.s32 %s13, 1
      %p243 = scmp.lt.s32.totalorder %s18, 1
      %s244 = scalar_select %p243, %s18, 1
      %s245 = smul.addr %s244, 32
      %s246 = smul.addr %s245, 8
      %s247 = scalar_lea.vmem %s0, %s246
      %p248 = pneg %p39
      %p249 = pneg %p36
      %p250 = pneg %p60
      %p251 = pneg %p57
      %p252 = pneg %p81
      %p253 = pneg %p78
      %p254 = pneg %p102
      %p255 = pneg %p99
      %p256 = pneg %p123
      %p257 = pneg %p120
      %p258 = pneg %p144
      %p259 = pneg %p141
      %p260 = pneg %p165
      %p261 = pneg %p162
      %p262 = pneg %p191
      %p263 = pneg %p188
      %p264 = scmp.lt.s32.totalorder %s18, 1
      %s265 = scalar_select %p264, %s18, 1
      %s266 = smul.addr %s265, 32
      %s267 = smul.addr %s266, 8
      %s268 = scalar_lea.vmem %s7, %s267
      %p269 = scmp.lt.s32.totalorder %s18, 1
      %s270 = scalar_select %p269, %s18, 1
      %s271 = smul.addr %s270, 32
      %s272 = smul.addr %s271, 8
      %s273 = scalar_lea.vmem %s0, %s272
      %p274 = scmp.lt.s32.totalorder %s18, 1
      %s275 = scalar_select %p274, %s18, 1
      %s276 = smul.addr %s275, 32
      %s277 = smul.addr %s276, 8
      %s278 = scalar_lea.vmem %s7, %s277
      %v280 = vld [vmem:[%s273] sm:$0xff]
      %v281 = vld [vmem:[%s273 + $0x8] sm:$0xff]
      %v282 = vld [vmem:[%s273 + $0x10] sm:$0xff]
      %v283 = vld [vmem:[%s273 + $0x18] sm:$0xff]
      %v284 = vld [vmem:[%s273 + $0x20] sm:$0xff]
      %v285 = vld [vmem:[%s273 + $0x28] sm:$0xff]
      %v286 = vld [vmem:[%s273 + $0x30] sm:$0xff]
      %v287 = vld [vmem:[%s273 + $0x38] sm:$0xff]
      %v288 = vld [vmem:[%s273 + $0x40] sm:$0xff]
      %v289 = vld [vmem:[%s273 + $0x48] sm:$0xff]
      %v290 = vld [vmem:[%s273 + $0x50] sm:$0xff]
      %v291 = vld [vmem:[%s273 + $0x58] sm:$0xff]
      %v292 = vld [vmem:[%s273 + $0x60] sm:$0xff]
      %v293 = vld [vmem:[%s273 + $0x68] sm:$0xff]
      %v294 = vld [vmem:[%s273 + $0x70] sm:$0xff]
      %v295 = vld [vmem:[%s273 + $0x78] sm:$0xff]
      %v296 = vld [vmem:[%s273 + $0x80] sm:$0xff]
      %v297 = vld [vmem:[%s273 + $0x88] sm:$0xff]
      %v298 = vld [vmem:[%s273 + $0x90] sm:$0xff]
      %v299 = vld [vmem:[%s273 + $0x98] sm:$0xff]
      %v300 = vld [vmem:[%s273 + $0xa0] sm:$0xff]
      %v301 = vld [vmem:[%s273 + $0xa8] sm:$0xff]
      %v302 = vld [vmem:[%s273 + $0xb0] sm:$0xff]
      %v303 = vld [vmem:[%s273 + $0xb8] sm:$0xff]
      %v304 = vld [vmem:[%s273 + $0xc0] sm:$0xff]
      %v305 = vld [vmem:[%s273 + $0xc8] sm:$0xff]
      %v306 = vld [vmem:[%s273 + $0xd0] sm:$0xff]
      %v307 = vld [vmem:[%s273 + $0xd8] sm:$0xff]
      %v308 = vld [vmem:[%s273 + $0xe0] sm:$0xff]
      %v309 = vld [vmem:[%s273 + $0xe8] sm:$0xff]
      %v310 = vld [vmem:[%s273 + $0xf0] sm:$0xff]
      %v311 = vld [vmem:[%s273 + $0xf8] sm:$0xff]
      %v312 = vld [vmem:[%s1] sm:$0x1]
      %v314 = vlaneseq
      %v315 = vshrl.u32 %v314, 7
      %v316 = vsub.s32 0, %v315
      %v317 = vrot.slane %v312, %v316
      %v319 = vmul.f32 %v280, %v317
      %v320 = vmul.f32 %v281, %v317
      %v321 = vmul.f32 %v282, %v317
      %v322 = vmul.f32 %v283, %v317
      %v323 = vmul.f32 %v284, %v317
      %v324 = vmul.f32 %v285, %v317
      %v325 = vmul.f32 %v286, %v317
      %v326 = vmul.f32 %v287, %v317
      %v327 = vmul.f32 %v288, %v317
      %v328 = vmul.f32 %v289, %v317
      %v329 = vmul.f32 %v290, %v317
      %v330 = vmul.f32 %v291, %v317
      %v331 = vmul.f32 %v292, %v317
      %v332 = vmul.f32 %v293, %v317
      %v333 = vmul.f32 %v294, %v317
      %v334 = vmul.f32 %v295, %v317
      %v335 = vmul.f32 %v296, %v317
      %v336 = vmul.f32 %v297, %v317
      %v337 = vmul.f32 %v298, %v317
      %v338 = vmul.f32 %v299, %v317
      %v339 = vmul.f32 %v300, %v317
      %v340 = vmul.f32 %v301, %v317
      %v341 = vmul.f32 %v302, %v317
      %v342 = vmul.f32 %v303, %v317
      %v343 = vmul.f32 %v304, %v317
      %v344 = vmul.f32 %v305, %v317
      %v345 = vmul.f32 %v306, %v317
      %v346 = vmul.f32 %v307, %v317
      %v347 = vmul.f32 %v308, %v317
      %v348 = vmul.f32 %v309, %v317
      %v349 = vmul.f32 %v310, %v317
      %v350 = vmul.f32 %v311, %v317
      %v351 = vld [vmem:[%s2] sm:$0x1]
      %v353 = vlaneseq
      %v354 = vshrl.u32 %v353, 7
      %v355 = vsub.s32 0, %v354
      %v356 = vrot.slane %v351, %v355
      %v358 = vadd.f32 %v319, %v356
      %v359 = vadd.f32 %v320, %v356
      %v360 = vadd.f32 %v321, %v356
      %v361 = vadd.f32 %v322, %v356
      %v362 = vadd.f32 %v323, %v356
      %v363 = vadd.f32 %v324, %v356
      %v364 = vadd.f32 %v325, %v356
      %v365 = vadd.f32 %v326, %v356
      %v366 = vadd.f32 %v327, %v356
      %v367 = vadd.f32 %v328, %v356
      %v368 = vadd.f32 %v329, %v356
      %v369 = vadd.f32 %v330, %v356
      %v370 = vadd.f32 %v331, %v356
      %v371 = vadd.f32 %v332, %v356
      %v372 = vadd.f32 %v333, %v356
      %v373 = vadd.f32 %v334, %v356
      %v374 = vadd.f32 %v335, %v356
      %v375 = vadd.f32 %v336, %v356
      %v376 = vadd.f32 %v337, %v356
      %v377 = vadd.f32 %v338, %v356
      %v378 = vadd.f32 %v339, %v356
      %v379 = vadd.f32 %v340, %v356
      %v380 = vadd.f32 %v341, %v356
      %v381 = vadd.f32 %v342, %v356
      %v382 = vadd.f32 %v343, %v356
      %v383 = vadd.f32 %v344, %v356
      %v384 = vadd.f32 %v345, %v356
      %v385 = vadd.f32 %v346, %v356
      %v386 = vadd.f32 %v347, %v356
      %v387 = vadd.f32 %v348, %v356
      %v388 = vadd.f32 %v349, %v356
      %v389 = vadd.f32 %v350, %v356
      %v390 = vmax.f32 %v358, 0.0
      %v391 = vmax.f32 %v359, 0.0
      %v392 = vmax.f32 %v360, 0.0
      %v393 = vmax.f32 %v361, 0.0
      %v394 = vmax.f32 %v362, 0.0
      %v395 = vmax.f32 %v363, 0.0
      %v396 = vmax.f32 %v364, 0.0
      %v397 = vmax.f32 %v365, 0.0
      %v398 = vmax.f32 %v366, 0.0
      %v399 = vmax.f32 %v367, 0.0
      %v400 = vmax.f32 %v368, 0.0
      %v401 = vmax.f32 %v369, 0.0
      %v402 = vmax.f32 %v370, 0.0
      %v403 = vmax.f32 %v371, 0.0
      %v404 = vmax.f32 %v372, 0.0
      %v405 = vmax.f32 %v373, 0.0
      %v406 = vmax.f32 %v374, 0.0
      %v407 = vmax.f32 %v375, 0.0
      %v408 = vmax.f32 %v376, 0.0
      %v409 = vmax.f32 %v377, 0.0
      %v410 = vmax.f32 %v378, 0.0
      %v411 = vmax.f32 %v379, 0.0
      %v412 = vmax.f32 %v380, 0.0
      %v413 = vmax.f32 %v381, 0.0
      %v414 = vmax.f32 %v382, 0.0
      %v415 = vmax.f32 %v383, 0.0
      %v416 = vmax.f32 %v384, 0.0
      %v417 = vmax.f32 %v385, 0.0
      %v418 = vmax.f32 %v386, 0.0
      %v419 = vmax.f32 %v387, 0.0
      %v420 = vmax.f32 %v388, 0.0
      %v421 = vmax.f32 %v389, 0.0
      %v422 = vpack.c.bf16 %v391, %v390
      %v423 = vpack.c.bf16 %v393, %v392
      %v424 = vpack.c.bf16 %v395, %v394
      %v425 = vpack.c.bf16 %v397, %v396
      %v426 = vpack.c.bf16 %v399, %v398
      %v427 = vpack.c.bf16 %v401, %v400
      %v428 = vpack.c.bf16 %v403, %v402
      %v429 = vpack.c.bf16 %v405, %v404
      %v430 = vpack.c.bf16 %v407, %v406
      %v431 = vpack.c.bf16 %v409, %v408
      %v432 = vpack.c.bf16 %v411, %v410
      %v433 = vpack.c.bf16 %v413, %v412
      %v434 = vpack.c.bf16 %v415, %v414
      %v435 = vpack.c.bf16 %v417, %v416
      %v436 = vpack.c.bf16 %v419, %v418
      %v437 = vpack.c.bf16 %v421, %v420
      %v438 = vld [vmem:[%s3] sm:$0xf]
      %vm439 = vcmask 64512
      %v441 = vsel %vm439, %v422, 0
      %v444 = vsel %vm439, %v423, 0
      %v447 = vsel %vm439, %v424, 0
      %v450 = vsel %vm439, %v425, 0
      %v453 = vsel %vm439, %v426, 0
      %v456 = vsel %vm439, %v427, 0
      %v459 = vsel %vm439, %v428, 0
      %v462 = vsel %vm439, %v429, 0
      %v465 = vsel %vm439, %v430, 0
      %v468 = vsel %vm439, %v431, 0
      %v471 = vsel %vm439, %v432, 0
      %v474 = vsel %vm439, %v433, 0
      %v477 = vsel %vm439, %v434, 0
      %v480 = vsel %vm439, %v435, 0
      %v483 = vsel %vm439, %v436, 0
      %v486 = vsel %vm439, %v437, 0
      %vm488 = vcmask 1043456
      %v490 = vsel %vm488, %v438, 0
      %492 = vmatprep.subr.bf16.mxu0 0
      %493 = vmatpush1.bf16.msra.mxu0 %v490
      %494 = vmatprep.subr.bf16.mxu0 0
      %495 = vmatpush1.bf16.msra.mxu0 0
      %496 = vmatprep.subr.bf16.mxu0 0
      %497 = vmatpush1.bf16.msra.mxu0 0
      %498 = vmatprep.subr.bf16.mxu0 0
      %499 = vmatpush1.bf16.msra.mxu0 0
      %500 = vmatprep.subr.bf16.mxu0 0
      %501 = vmatpush1.bf16.msra.mxu0 0
      %502 = vmatprep.subr.bf16.mxu0 0
      %503 = vmatpush1.bf16.msra.mxu0 0
      %504 = vmatprep.subr.bf16.mxu0 0
      %505 = vmatpush1.bf16.msra.mxu0 0
      %506 = vmatprep.subr.bf16.mxu0 0
      %507 = vmatpush1.bf16.msra.mxu0 0
      %508 = vmatprep.subr.bf16.mxu0 0
      %509 = vmatpush1.bf16.msra.mxu0 0
      %510 = vmatprep.subr.bf16.mxu0 0
      %511 = vmatpush1.bf16.msra.mxu0 0
      %512 = vmatprep.subr.bf16.mxu0 0
      %513 = vmatpush1.bf16.msra.mxu0 0
      %514 = vmatprep.subr.bf16.mxu0 0
      %515 = vmatpush1.bf16.msra.mxu0 0
      %516 = vmatprep.subr.bf16.mxu0 0
      %517 = vmatpush1.bf16.msra.mxu0 0
      %518 = vmatprep.subr.bf16.mxu0 0
      %519 = vmatpush1.bf16.msra.mxu0 0
      %520 = vmatprep.subr.bf16.mxu0 0
      %521 = vmatpush1.bf16.msra.mxu0 0
      %522 = vmatprep.subr.bf16.mxu0 0
      %523 = vmatpush1.bf16.msra.mxu0 0
      %524 = vmatprep.mubr.bf16.mxu0 0
      %525 = vmatmul.mubr.bf16.gmra.mrb[0].mxu0 %v441
      %v526 = vpop.f32.mrb[0].mxu0
      %v527 = vadd.f32 0.0, %v526
      %v528 = vpop.f32.mrb[0].mxu0
      %v529 = vpop.f32.mrb[0].mxu0
      %v530 = vadd.f32 0.0, %v529
      %v531 = vpop.f32.mrb[0].mxu0
      %532 = vmatprep.mubr.bf16.mxu0 0
      %533 = vmatmul.mubr.bf16.gmra.mrb[0].mxu0 %v444
      %v534 = vpop.f32.mrb[0].mxu0
      %v535 = vadd.f32 0.0, %v534
      %v536 = vpop.f32.mrb[0].mxu0
      %v537 = vpop.f32.mrb[0].mxu0
      %v538 = vadd.f32 0.0, %v537
      %v539 = vpop.f32.mrb[0].mxu0
      %540 = vmatprep.mubr.bf16.mxu0 0
      %541 = vmatmul.mubr.bf16.gmra.mrb[0].mxu0 %v447
      %v542 = vpop.f32.mrb[0].mxu0
      %v543 = vadd.f32 0.0, %v542
      %v544 = vpop.f32.mrb[0].mxu0
      %v545 = vpop.f32.mrb[0].mxu0
      %v546 = vadd.f32 0.0, %v545
      %v547 = vpop.f32.mrb[0].mxu0
      %548 = vmatprep.mubr.bf16.mxu0 0
      %549 = vmatmul.mubr.bf16.gmra.mrb[0].mxu0 %v450
      %v550 = vpop.f32.mrb[0].mxu0
      %v551 = vadd.f32 0.0, %v550
      %v552 = vpop.f32.mrb[0].mxu0
      %v553 = vpop.f32.mrb[0].mxu0
      %v554 = vadd.f32 0.0, %v553
      %v555 = vpop.f32.mrb[0].mxu0
      %556 = vmatprep.mubr.bf16.mxu0 0
      %557 = vmatmul.mubr.bf16.gmra.mrb[0].mxu0 %v453
      %v558 = vpop.f32.mrb[0].mxu0
      %v559 = vadd.f32 0.0, %v558
      %v560 = vpop.f32.mrb[0].mxu0
      %v561 = vpop.f32.mrb[0].mxu0
      %v562 = vadd.f32 0.0, %v561
      %v563 = vpop.f32.mrb[0].mxu0
      %564 = vmatprep.mubr.bf16.mxu0 0
      %565 = vmatmul.mubr.bf16.gmra.mrb[0].mxu0 %v456
      %v566 = vpop.f32.mrb[0].mxu0
      %v567 = vadd.f32 0.0, %v566
      %v568 = vpop.f32.mrb[0].mxu0
      %v569 = vpop.f32.mrb[0].mxu0
      %v570 = vadd.f32 0.0, %v569
      %v571 = vpop.f32.mrb[0].mxu0
      %572 = vmatprep.mubr.bf16.mxu0 0
      %573 = vmatmul.mubr.bf16.gmra.mrb[0].mxu0 %v459
      %v574 = vpop.f32.mrb[0].mxu0
      %v575 = vadd.f32 0.0, %v574
      %v576 = vpop.f32.mrb[0].mxu0
      %v577 = vpop.f32.mrb[0].mxu0
      %v578 = vadd.f32 0.0, %v577
      %v579 = vpop.f32.mrb[0].mxu0
      %580 = vmatprep.mubr.bf16.mxu0 0
      %581 = vmatmul.mubr.bf16.gmra.mrb[0].mxu0 %v462
      %v582 = vpop.f32.mrb[0].mxu0
      %v583 = vadd.f32 0.0, %v582
      %v584 = vpop.f32.mrb[0].mxu0
      %v585 = vpop.f32.mrb[0].mxu0
      %v586 = vadd.f32 0.0, %v585
      %v587 = vpop.f32.mrb[0].mxu0
      %588 = vmatprep.mubr.bf16.mxu0 0
      %589 = vmatmul.mubr.bf16.gmra.mrb[0].mxu0 %v465
      %v590 = vpop.f32.mrb[0].mxu0
      %v591 = vadd.f32 0.0, %v590
      %v592 = vpop.f32.mrb[0].mxu0
      %v593 = vpop.f32.mrb[0].mxu0
      %v594 = vadd.f32 0.0, %v593
      %v595 = vpop.f32.mrb[0].mxu0
      %596 = vmatprep.mubr.bf16.mxu0 0
      %597 = vmatmul.mubr.bf16.gmra.mrb[0].mxu0 %v468
      %v598 = vpop.f32.mrb[0].mxu0
      %v599 = vadd.f32 0.0, %v598
      %v600 = vpop.f32.mrb[0].mxu0
      %v601 = vpop.f32.mrb[0].mxu0
      %v602 = vadd.f32 0.0, %v601
      %v603 = vpop.f32.mrb[0].mxu0
      %604 = vmatprep.mubr.bf16.mxu0 0
      %605 = vmatmul.mubr.bf16.gmra.mrb[0].mxu0 %v471
      %v606 = vpop.f32.mrb[0].mxu0
      %v607 = vadd.f32 0.0, %v606
      %v608 = vpop.f32.mrb[0].mxu0
      %v609 = vpop.f32.mrb[0].mxu0
      %v610 = vadd.f32 0.0, %v609
      %v611 = vpop.f32.mrb[0].mxu0
      %612 = vmatprep.mubr.bf16.mxu0 0
      %613 = vmatmul.mubr.bf16.gmra.mrb[0].mxu0 %v474
      %v614 = vpop.f32.mrb[0].mxu0
      %v615 = vadd.f32 0.0, %v614
      %v616 = vpop.f32.mrb[0].mxu0
      %v617 = vpop.f32.mrb[0].mxu0
      %v618 = vadd.f32 0.0, %v617
      %v619 = vpop.f32.mrb[0].mxu0
      %620 = vmatprep.mubr.bf16.mxu0 0
      %621 = vmatmul.mubr.bf16.gmra.mrb[0].mxu0 %v477
      %v622 = vpop.f32.mrb[0].mxu0
      %v623 = vadd.f32 0.0, %v622
      %v624 = vpop.f32.mrb[0].mxu0
      %v625 = vpop.f32.mrb[0].mxu0
      %v626 = vadd.f32 0.0, %v625
      %v627 = vpop.f32.mrb[0].mxu0
      %628 = vmatprep.mubr.bf16.mxu0 0
      %629 = vmatmul.mubr.bf16.gmra.mrb[0].mxu0 %v480
      %v630 = vpop.f32.mrb[0].mxu0
      %v631 = vadd.f32 0.0, %v630
      %v632 = vpop.f32.mrb[0].mxu0
      %v633 = vpop.f32.mrb[0].mxu0
      %v634 = vadd.f32 0.0, %v633
      %v635 = vpop.f32.mrb[0].mxu0
      %636 = vmatprep.mubr.bf16.mxu0 0
      %637 = vmatmul.mubr.bf16.gmra.mrb[0].mxu0 %v483
      %v638 = vpop.f32.mrb[0].mxu0
      %v639 = vadd.f32 0.0, %v638
      %v640 = vpop.f32.mrb[0].mxu0
      %v641 = vpop.f32.mrb[0].mxu0
      %v642 = vadd.f32 0.0, %v641
      %v643 = vpop.f32.mrb[0].mxu0
      %644 = vmatprep.mubr.bf16.mxu0 0
      %645 = vmatmul.mubr.bf16.gmra.mrb[0].mxu0 %v486
      %v646 = vpop.f32.mrb[0].mxu0
      %v647 = vadd.f32 0.0, %v646
      %v648 = vpop.f32.mrb[0].mxu0
      %v649 = vpop.f32.mrb[0].mxu0
      %v650 = vadd.f32 0.0, %v649
      %v651 = vpop.f32.mrb[0].mxu0
      %652 = vdwg.mxu0
      %v653 = vld [vmem:[%s4] sm:$0x1]
      %v655 = vlaneseq
      %v656 = vshrl.u32 %v655, 7
      %v657 = vsub.s32 0, %v656
      %v658 = vrot.slane %v653, %v657
      %v660 = vmul.f32 %v527, %v658
      %v661 = vmul.f32 %v530, %v658
      %v662 = vmul.f32 %v535, %v658
      %v663 = vmul.f32 %v538, %v658
      %v664 = vmul.f32 %v543, %v658
      %v665 = vmul.f32 %v546, %v658
      %v666 = vmul.f32 %v551, %v658
      %v667 = vmul.f32 %v554, %v658
      %v668 = vmul.f32 %v559, %v658
      %v669 = vmul.f32 %v562, %v658
      %v670 = vmul.f32 %v567, %v658
      %v671 = vmul.f32 %v570, %v658
      %v672 = vmul.f32 %v575, %v658
      %v673 = vmul.f32 %v578, %v658
      %v674 = vmul.f32 %v583, %v658
      %v675 = vmul.f32 %v586, %v658
      %v676 = vmul.f32 %v591, %v658
      %v677 = vmul.f32 %v594, %v658
      %v678 = vmul.f32 %v599, %v658
      %v679 = vmul.f32 %v602, %v658
      %v680 = vmul.f32 %v607, %v658
      %v681 = vmul.f32 %v610, %v658
      %v682 = vmul.f32 %v615, %v658
      %v683 = vmul.f32 %v618, %v658
      %v684 = vmul.f32 %v623, %v658
      %v685 = vmul.f32 %v626, %v658
      %v686 = vmul.f32 %v631, %v658
      %v687 = vmul.f32 %v634, %v658
      %v688 = vmul.f32 %v639, %v658
      %v689 = vmul.f32 %v642, %v658
      %v690 = vmul.f32 %v647, %v658
      %v691 = vmul.f32 %v650, %v658
      %v692 = vld [vmem:[%s5] sm:$0x1]
      %v694 = vlaneseq
      %v695 = vshrl.u32 %v694, 7
      %v696 = vsub.s32 0, %v695
      %v697 = vrot.slane %v692, %v696
      %v699 = vadd.f32 %v660, %v697
      %v700 = vadd.f32 %v661, %v697
      %v701 = vadd.f32 %v662, %v697
      %v702 = vadd.f32 %v663, %v697
      %v703 = vadd.f32 %v664, %v697
      %v704 = vadd.f32 %v665, %v697
      %v705 = vadd.f32 %v666, %v697
      %v706 = vadd.f32 %v667, %v697
      %v707 = vadd.f32 %v668, %v697
      %v708 = vadd.f32 %v669, %v697
      %v709 = vadd.f32 %v670, %v697
      %v710 = vadd.f32 %v671, %v697
      %v711 = vadd.f32 %v672, %v697
      %v712 = vadd.f32 %v673, %v697
      %v713 = vadd.f32 %v674, %v697
      %v714 = vadd.f32 %v675, %v697
      %v715 = vadd.f32 %v676, %v697
      %v716 = vadd.f32 %v677, %v697
      %v717 = vadd.f32 %v678, %v697
      %v718 = vadd.f32 %v679, %v697
      %v719 = vadd.f32 %v680, %v697
      %v720 = vadd.f32 %v681, %v697
      %v721 = vadd.f32 %v682, %v697
      %v722 = vadd.f32 %v683, %v697
      %v723 = vadd.f32 %v684, %v697
      %v724 = vadd.f32 %v685, %v697
      %v725 = vadd.f32 %v686, %v697
      %v726 = vadd.f32 %v687, %v697
      %v727 = vadd.f32 %v688, %v697
      %v728 = vadd.f32 %v689, %v697
      %v729 = vadd.f32 %v690, %v697
      %v730 = vadd.f32 %v691, %v697
      %v731 = vmax.f32 %v699, 0.0
      %v732 = vmax.f32 %v700, 0.0
      %v733 = vmax.f32 %v701, 0.0
      %v734 = vmax.f32 %v702, 0.0
      %v735 = vmax.f32 %v703, 0.0
      %v736 = vmax.f32 %v704, 0.0
      %v737 = vmax.f32 %v705, 0.0
      %v738 = vmax.f32 %v706, 0.0
      %v739 = vmax.f32 %v707, 0.0
      %v740 = vmax.f32 %v708, 0.0
      %v741 = vmax.f32 %v709, 0.0
      %v742 = vmax.f32 %v710, 0.0
      %v743 = vmax.f32 %v711, 0.0
      %v744 = vmax.f32 %v712, 0.0
      %v745 = vmax.f32 %v713, 0.0
      %v746 = vmax.f32 %v714, 0.0
      %v747 = vmax.f32 %v715, 0.0
      %v748 = vmax.f32 %v716, 0.0
      %v749 = vmax.f32 %v717, 0.0
      %v750 = vmax.f32 %v718, 0.0
      %v751 = vmax.f32 %v719, 0.0
      %v752 = vmax.f32 %v720, 0.0
      %v753 = vmax.f32 %v721, 0.0
      %v754 = vmax.f32 %v722, 0.0
      %v755 = vmax.f32 %v723, 0.0
      %v756 = vmax.f32 %v724, 0.0
      %v757 = vmax.f32 %v725, 0.0
      %v758 = vmax.f32 %v726, 0.0
      %v759 = vmax.f32 %v727, 0.0
      %v760 = vmax.f32 %v728, 0.0
      %v761 = vmax.f32 %v729, 0.0
      %v762 = vmax.f32 %v730, 0.0
      %763 = vst.msk [vmem:[#allocation2] sm:$0xff] %vm439, 0.0
      %764 = vst.msk [vmem:[#allocation2 + $0x8] sm:$0xff] %vm439, 0.0
      %vm765 = vcmask 58368
      %766 = vst.msk [vmem:[#allocation2 + $0x10] sm:$0x3] %vm765, 0.0
      %767 = vst.msk [vmem:[#allocation2 + $0x18] sm:$0xff] %vm439, 0.0
      %768 = vst.msk [vmem:[#allocation2 + $0x20] sm:$0xff] %vm439, 0.0
      %769 = vst.msk [vmem:[#allocation2 + $0x28] sm:$0x3] %vm765, 0.0
      %770 = vst.msk [vmem:[#allocation2 + $0x30] sm:$0xff] %vm439, 0.0
      %771 = vst.msk [vmem:[#allocation2 + $0x38] sm:$0xff] %vm439, 0.0
      %772 = vst.msk [vmem:[#allocation2 + $0x40] sm:$0x3] %vm765, 0.0
      %773 = vst.msk [vmem:[#allocation2 + $0x48] sm:$0xff] %vm439, 0.0
      %774 = vst.msk [vmem:[#allocation2 + $0x50] sm:$0xff] %vm439, 0.0
      %775 = vst.msk [vmem:[#allocation2 + $0x58] sm:$0x3] %vm765, 0.0
      %776 = vst.msk [vmem:[#allocation2 + $0x60] sm:$0xff] %vm439, 0.0
      %777 = vst.msk [vmem:[#allocation2 + $0x68] sm:$0xff] %vm439, 0.0
      %778 = vst.msk [vmem:[#allocation2 + $0x70] sm:$0x3] %vm765, 0.0
      %779 = vst.msk [vmem:[#allocation2 + $0x78] sm:$0xff] %vm439, 0.0
      %780 = vst.msk [vmem:[#allocation2 + $0x80] sm:$0xff] %vm439, 0.0
      %781 = vst.msk [vmem:[#allocation2 + $0x88] sm:$0x3] %vm765, 0.0
      %782 = vst.msk [vmem:[#allocation2 + $0x90] sm:$0xff] %vm439, 0.0
      %783 = vst.msk [vmem:[#allocation2 + $0x98] sm:$0xff] %vm439, 0.0
      %784 = vst.msk [vmem:[#allocation2 + $0xa0] sm:$0x3] %vm765, 0.0
      %785 = vst.msk [vmem:[#allocation2 + $0xa8] sm:$0xff] %vm439, 0.0
      %786 = vst.msk [vmem:[#allocation2 + $0xb0] sm:$0xff] %vm439, 0.0
      %787 = vst.msk [vmem:[#allocation2 + $0xb8] sm:$0x3] %vm765, 0.0
      %788 = vst.msk [vmem:[#allocation2 + $0xc0] sm:$0xff] %vm439, 0.0
      %789 = vst.msk [vmem:[#allocation2 + $0xc8] sm:$0xff] %vm439, 0.0
      %790 = vst.msk [vmem:[#allocation2 + $0xd0] sm:$0x3] %vm765, 0.0
      %791 = vst.msk [vmem:[#allocation2 + $0xd8] sm:$0xff] %vm439, 0.0
      %792 = vst.msk [vmem:[#allocation2 + $0xe0] sm:$0xff] %vm439, 0.0
      %793 = vst.msk [vmem:[#allocation2 + $0xe8] sm:$0x3] %vm765, 0.0
      %794 = vst.msk [vmem:[#allocation2 + $0xf0] sm:$0xff] %vm439, 0.0
      %795 = vst.msk [vmem:[#allocation2 + $0xf8] sm:$0xff] %vm439, 0.0
      %796 = vst.msk [vmem:[#allocation2 + $0x100] sm:$0x3] %vm765, 0.0
      %797 = vst.msk [vmem:[#allocation2 + $0x108] sm:$0xff] %vm439, 0.0
      %798 = vst.msk [vmem:[#allocation2 + $0x110] sm:$0xff] %vm439, 0.0
      %799 = vst.msk [vmem:[#allocation2 + $0x118] sm:$0x3] %vm765, 0.0
      %800 = vst.msk [vmem:[#allocation2 + $0x120] sm:$0xff] %vm439, 0.0
      %801 = vst.msk [vmem:[#allocation2 + $0x128] sm:$0xff] %vm439, 0.0
      %802 = vst.msk [vmem:[#allocation2 + $0x130] sm:$0x3] %vm765, 0.0
      %803 = vst.msk [vmem:[#allocation2 + $0x138] sm:$0xff] %vm439, 0.0
      %804 = vst.msk [vmem:[#allocation2 + $0x140] sm:$0xff] %vm439, 0.0
      %805 = vst.msk [vmem:[#allocation2 + $0x148] sm:$0x3] %vm765, 0.0
      %806 = vst.msk [vmem:[#allocation2 + $0x150] sm:$0xff] %vm439, 0.0
      %807 = vst.msk [vmem:[#allocation2 + $0x158] sm:$0xff] %vm439, 0.0
      %808 = vst.msk [vmem:[#allocation2 + $0x160] sm:$0x3] %vm765, 0.0
      %809 = vst.msk [vmem:[#allocation2 + $0x168] sm:$0xff] %vm439, 0.0
      %810 = vst.msk [vmem:[#allocation2 + $0x170] sm:$0xff] %vm439, 0.0
      %811 = vst.msk [vmem:[#allocation2 + $0x178] sm:$0x3] %vm765, 0.0
      %812 = vst.msk [vmem:[#allocation2 + $0x180] sm:$0xff] %vm439, 0.0
      %813 = vst.msk [vmem:[#allocation2 + $0x188] sm:$0xff] %vm439, 0.0
      %814 = vst.msk [vmem:[#allocation2 + $0x190] sm:$0x3] %vm765, 0.0
      %815 = vst.msk [vmem:[#allocation2 + $0x198] sm:$0xff] %vm439, 0.0
      %816 = vst.msk [vmem:[#allocation2 + $0x1a0] sm:$0xff] %vm439, 0.0
      %817 = vst.msk [vmem:[#allocation2 + $0x1a8] sm:$0x3] %vm765, 0.0
      %s818 = scalar_lea.vmem [#allocation2], 24
      %819 = vst.msk [vmem:[%s818 + $0x1] sm:$0xff] %vm439, %v731
      %820 = vst.msk [vmem:[%s818 + $0x9] sm:$0xff] %vm439, %v732
      %821 = vst.msk [vmem:[%s818 + $0x19] sm:$0xff] %vm439, %v733
      %822 = vst.msk [vmem:[%s818 + $0x21] sm:$0xff] %vm439, %v734
      %823 = vst.msk [vmem:[%s818 + $0x31] sm:$0xff] %vm439, %v735
      %824 = vst.msk [vmem:[%s818 + $0x39] sm:$0xff] %vm439, %v736
      %825 = vst.msk [vmem:[%s818 + $0x49] sm:$0xff] %vm439, %v737
      %826 = vst.msk [vmem:[%s818 + $0x51] sm:$0xff] %vm439, %v738
      %827 = vst.msk [vmem:[%s818 + $0x61] sm:$0xff] %vm439, %v739
      %828 = vst.msk [vmem:[%s818 + $0x69] sm:$0xff] %vm439, %v740
      %829 = vst.msk [vmem:[%s818 + $0x79] sm:$0xff] %vm439, %v741
      %830 = vst.msk [vmem:[%s818 + $0x81] sm:$0xff] %vm439, %v742
      %831 = vst.msk [vmem:[%s818 + $0x91] sm:$0xff] %vm439, %v743
      %832 = vst.msk [vmem:[%s818 + $0x99] sm:$0xff] %vm439, %v744
      %833 = vst.msk [vmem:[%s818 + $0xa9] sm:$0xff] %vm439, %v745
      %834 = vst.msk [vmem:[%s818 + $0xb1] sm:$0xff] %vm439, %v746
      %835 = vst.msk [vmem:[%s818 + $0xc1] sm:$0xff] %vm439, %v747
      %836 = vst.msk [vmem:[%s818 + $0xc9] sm:$0xff] %vm439, %v748
      %837 = vst.msk [vmem:[%s818 + $0xd9] sm:$0xff] %vm439, %v749
      %838 = vst.msk [vmem:[%s818 + $0xe1] sm:$0xff] %vm439, %v750
      %839 = vst.msk [vmem:[%s818 + $0xf1] sm:$0xff] %vm439, %v751
      %840 = vst.msk [vmem:[%s818 + $0xf9] sm:$0xff] %vm439, %v752
      %841 = vst.msk [vmem:[%s818 + $0x109] sm:$0xff] %vm439, %v753
      %842 = vst.msk [vmem:[%s818 + $0x111] sm:$0xff] %vm439, %v754
      %843 = vst.msk [vmem:[%s818 + $0x121] sm:$0xff] %vm439, %v755
      %844 = vst.msk [vmem:[%s818 + $0x129] sm:$0xff] %vm439, %v756
      %845 = vst.msk [vmem:[%s818 + $0x139] sm:$0xff] %vm439, %v757
      %846 = vst.msk [vmem:[%s818 + $0x141] sm:$0xff] %vm439, %v758
      %847 = vst.msk [vmem:[%s818 + $0x151] sm:$0xff] %vm439, %v759
      %848 = vst.msk [vmem:[%s818 + $0x159] sm:$0xff] %vm439, %v760
      %849 = vst.msk [vmem:[%s818 + $0x169] sm:$0xff] %vm439, %v761
      %850 = vst.msk [vmem:[%s818 + $0x171] sm:$0xff] %vm439, %v762
      %v851 = vld [vmem:[#allocation2] sm:$0xff]
      %v852 = vld [vmem:[#allocation2 + $0x8] sm:$0xff]
      %v853 = vld [vmem:[#allocation2 + $0x18] sm:$0xff]
      %v854 = vld [vmem:[#allocation2 + $0x20] sm:$0xff]
      %v855 = vld [vmem:[#allocation2 + $0x30] sm:$0xff]
      %v856 = vld [vmem:[#allocation2 + $0x38] sm:$0xff]
      %v857 = vld [vmem:[#allocation2 + $0x48] sm:$0xff]
      %v858 = vld [vmem:[#allocation2 + $0x50] sm:$0xff]
      %v859 = vld [vmem:[#allocation2 + $0x60] sm:$0xff]
      %v860 = vld [vmem:[#allocation2 + $0x68] sm:$0xff]
      %v861 = vld [vmem:[#allocation2 + $0x78] sm:$0xff]
      %v862 = vld [vmem:[#allocation2 + $0x80] sm:$0xff]
      %v863 = vld [vmem:[#allocation2 + $0x90] sm:$0xff]
      %v864 = vld [vmem:[#allocation2 + $0x98] sm:$0xff]
      %v865 = vld [vmem:[#allocation2 + $0xa8] sm:$0xff]
      %v866 = vld [vmem:[#allocation2 + $0xb0] sm:$0xff]
      %v867 = vld [vmem:[#allocation2 + $0xc0] sm:$0xff]
      %v868 = vld [vmem:[#allocation2 + $0xc8] sm:$0xff]
      %v869 = vld [vmem:[#allocation2 + $0xd8] sm:$0xff]
      %v870 = vld [vmem:[#allocation2 + $0xe0] sm:$0xff]
      %v871 = vld [vmem:[#allocation2 + $0xf0] sm:$0xff]
      %v872 = vld [vmem:[#allocation2 + $0xf8] sm:$0xff]
      %v873 = vld [vmem:[#allocation2 + $0x108] sm:$0xff]
      %v874 = vld [vmem:[#allocation2 + $0x110] sm:$0xff]
      %v875 = vld [vmem:[#allocation2 + $0x120] sm:$0xff]
      %v876 = vld [vmem:[#allocation2 + $0x128] sm:$0xff]
      %v877 = vld [vmem:[#allocation2 + $0x138] sm:$0xff]
      %v878 = vld [vmem:[#allocation2 + $0x140] sm:$0xff]
      %v879 = vld [vmem:[#allocation2 + $0x150] sm:$0xff]
      %v880 = vld [vmem:[#allocation2 + $0x158] sm:$0xff]
      %v881 = vld [vmem:[#allocation2 + $0x168] sm:$0xff]
      %v882 = vld [vmem:[#allocation2 + $0x170] sm:$0xff]
      %v883 = vld [vmem:[#allocation2 + $0x1] sm:$0xff]
      %v884 = vld [vmem:[#allocation2 + $0x9] sm:$0xff]
      %v885 = vld [vmem:[#allocation2 + $0x19] sm:$0xff]
      %v886 = vld [vmem:[#allocation2 + $0x21] sm:$0xff]
      %v887 = vld [vmem:[#allocation2 + $0x31] sm:$0xff]
      %v888 = vld [vmem:[#allocation2 + $0x39] sm:$0xff]
      %v889 = vld [vmem:[#allocation2 + $0x49] sm:$0xff]
      %v890 = vld [vmem:[#allocation2 + $0x51] sm:$0xff]
      %v891 = vld [vmem:[#allocation2 + $0x61] sm:$0xff]
      %v892 = vld [vmem:[#allocation2 + $0x69] sm:$0xff]
      %v893 = vld [vmem:[#allocation2 + $0x79] sm:$0xff]
      %v894 = vld [vmem:[#allocation2 + $0x81] sm:$0xff]
      %v895 = vld [vmem:[#allocation2 + $0x91] sm:$0xff]
      %v896 = vld [vmem:[#allocation2 + $0x99] sm:$0xff]
      %v897 = vld [vmem:[#allocation2 + $0xa9] sm:$0xff]
      %v898 = vld [vmem:[#allocation2 + $0xb1] sm:$0xff]
      %v899 = vld [vmem:[#allocation2 + $0xc1] sm:$0xff]
      %v900 = vld [vmem:[#allocation2 + $0xc9] sm:$0xff]
      %v901 = vld [vmem:[#allocation2 + $0xd9] sm:$0xff]
      %v902 = vld [vmem:[#allocation2 + $0xe1] sm:$0xff]
      %v903 = vld [vmem:[#allocation2 + $0xf1] sm:$0xff]
      %v904 = vld [vmem:[#allocation2 + $0xf9] sm:$0xff]
      %v905 = vld [vmem:[#allocation2 + $0x109] sm:$0xff]
      %v906 = vld [vmem:[#allocation2 + $0x111] sm:$0xff]
      %v907 = vld [vmem:[#allocation2 + $0x121] sm:$0xff]
      %v908 = vld [vmem:[#allocation2 + $0x129] sm:$0xff]
      %v909 = vld [vmem:[#allocation2 + $0x139] sm:$0xff]
      %v910 = vld [vmem:[#allocation2 + $0x141] sm:$0xff]
      %v911 = vld [vmem:[#allocation2 + $0x151] sm:$0xff]
      %v912 = vld [vmem:[#allocation2 + $0x159] sm:$0xff]
      %v913 = vld [vmem:[#allocation2 + $0x169] sm:$0xff]
      %v914 = vld [vmem:[#allocation2 + $0x171] sm:$0xff]
      %v915 = vld [vmem:[#allocation2 + $0x2] sm:$0xff]
      %v916 = vld [vmem:[#allocation2 + $0xa] sm:$0xff]
      %v917 = vld [vmem:[#allocation2 + $0x1a] sm:$0xff]
      %v918 = vld [vmem:[#allocation2 + $0x22] sm:$0xff]
      %v919 = vld [vmem:[#allocation2 + $0x32] sm:$0xff]
      %v920 = vld [vmem:[#allocation2 + $0x3a] sm:$0xff]
      %v921 = vld [vmem:[#allocation2 + $0x4a] sm:$0xff]
      %v922 = vld [vmem:[#allocation2 + $0x52] sm:$0xff]
      %v923 = vld [vmem:[#allocation2 + $0x62] sm:$0xff]
      %v924 = vld [vmem:[#allocation2 + $0x6a] sm:$0xff]
      %v925 = vld [vmem:[#allocation2 + $0x7a] sm:$0xff]
      %v926 = vld [vmem:[#allocation2 + $0x82] sm:$0xff]
      %v927 = vld [vmem:[#allocation2 + $0x92] sm:$0xff]
      %v928 = vld [vmem:[#allocation2 + $0x9a] sm:$0xff]
      %v929 = vld [vmem:[#allocation2 + $0xaa] sm:$0xff]
      %v930 = vld [vmem:[#allocation2 + $0xb2] sm:$0xff]
      %v931 = vld [vmem:[#allocation2 + $0xc2] sm:$0xff]
      %v932 = vld [vmem:[#allocation2 + $0xca] sm:$0xff]
      %v933 = vld [vmem:[#allocation2 + $0xda] sm:$0xff]
      %v934 = vld [vmem:[#allocation2 + $0xe2] sm:$0xff]
      %v935 = vld [vmem:[#allocation2 + $0xf2] sm:$0xff]
      %v936 = vld [vmem:[#allocation2 + $0xfa] sm:$0xff]
      %v937 = vld [vmem:[#allocation2 + $0x10a] sm:$0xff]
      %v938 = vld [vmem:[#allocation2 + $0x112] sm:$0xff]
      %v939 = vld [vmem:[#allocation2 + $0x122] sm:$0xff]
      %v940 = vld [vmem:[#allocation2 + $0x12a] sm:$0xff]
      %v941 = vld [vmem:[#allocation2 + $0x13a] sm:$0xff]
      %v942 = vld [vmem:[#allocation2 + $0x142] sm:$0xff]
      %v943 = vld [vmem:[#allocation2 + $0x152] sm:$0xff]
      %v944 = vld [vmem:[#allocation2 + $0x15a] sm:$0xff]
      %v945 = vld [vmem:[#allocation2 + $0x16a] sm:$0xff]
      %v946 = vld [vmem:[#allocation2 + $0x172] sm:$0xff]
      %v947 = vld [vmem:[%s818] sm:$0xff]
      %v948 = vld [vmem:[%s818 + $0x8] sm:$0xff]
      %v949 = vld [vmem:[%s818 + $0x18] sm:$0xff]
      %v950 = vld [vmem:[%s818 + $0x20] sm:$0xff]
      %v951 = vld [vmem:[%s818 + $0x30] sm:$0xff]
      %v952 = vld [vmem:[%s818 + $0x38] sm:$0xff]
      %v953 = vld [vmem:[%s818 + $0x48] sm:$0xff]
      %v954 = vld [vmem:[%s818 + $0x50] sm:$0xff]
      %v955 = vld [vmem:[%s818 + $0x60] sm:$0xff]
      %v956 = vld [vmem:[%s818 + $0x68] sm:$0xff]
      %v957 = vld [vmem:[%s818 + $0x78] sm:$0xff]
      %v958 = vld [vmem:[%s818 + $0x80] sm:$0xff]
      %v959 = vld [vmem:[%s818 + $0x90] sm:$0xff]
      %v960 = vld [vmem:[%s818 + $0x98] sm:$0xff]
      %v961 = vld [vmem:[%s818 + $0xa8] sm:$0xff]
      %v962 = vld [vmem:[%s818 + $0xb0] sm:$0xff]
      %v963 = vld [vmem:[%s818 + $0xc0] sm:$0xff]
      %v964 = vld [vmem:[%s818 + $0xc8] sm:$0xff]
      %v965 = vld [vmem:[%s818 + $0xd8] sm:$0xff]
      %v966 = vld [vmem:[%s818 + $0xe0] sm:$0xff]
      %v967 = vld [vmem:[%s818 + $0xf0] sm:$0xff]
      %v968 = vld [vmem:[%s818 + $0xf8] sm:$0xff]
      %v969 = vld [vmem:[%s818 + $0x108] sm:$0xff]
      %v970 = vld [vmem:[%s818 + $0x110] sm:$0xff]
      %v971 = vld [vmem:[%s818 + $0x120] sm:$0xff]
      %v972 = vld [vmem:[%s818 + $0x128] sm:$0xff]
      %v973 = vld [vmem:[%s818 + $0x138] sm:$0xff]
      %v974 = vld [vmem:[%s818 + $0x140] sm:$0xff]
      %v975 = vld [vmem:[%s818 + $0x150] sm:$0xff]
      %v976 = vld [vmem:[%s818 + $0x158] sm:$0xff]
      %v977 = vld [vmem:[%s818 + $0x168] sm:$0xff]
      %v978 = vld [vmem:[%s818 + $0x170] sm:$0xff]
      %v979 = vld [vmem:[%s818 + $0x1] sm:$0xff]
      %v980 = vld [vmem:[%s818 + $0x9] sm:$0xff]
      %v981 = vld [vmem:[%s818 + $0x19] sm:$0xff]
      %v982 = vld [vmem:[%s818 + $0x21] sm:$0xff]
      %v983 = vld [vmem:[%s818 + $0x31] sm:$0xff]
      %v984 = vld [vmem:[%s818 + $0x39] sm:$0xff]
      %v985 = vld [vmem:[%s818 + $0x49] sm:$0xff]
      %v986 = vld [vmem:[%s818 + $0x51] sm:$0xff]
      %v987 = vld [vmem:[%s818 + $0x61] sm:$0xff]
      %v988 = vld [vmem:[%s818 + $0x69] sm:$0xff]
      %v989 = vld [vmem:[%s818 + $0x79] sm:$0xff]
      %v990 = vld [vmem:[%s818 + $0x81] sm:$0xff]
      %v991 = vld [vmem:[%s818 + $0x91] sm:$0xff]
      %v992 = vld [vmem:[%s818 + $0x99] sm:$0xff]
      %v993 = vld [vmem:[%s818 + $0xa9] sm:$0xff]
      %v994 = vld [vmem:[%s818 + $0xb1] sm:$0xff]
      %v995 = vld [vmem:[%s818 + $0xc1] sm:$0xff]
      %v996 = vld [vmem:[%s818 + $0xc9] sm:$0xff]
      %v997 = vld [vmem:[%s818 + $0xd9] sm:$0xff]
      %v998 = vld [vmem:[%s818 + $0xe1] sm:$0xff]
      %v999 = vld [vmem:[%s818 + $0xf1] sm:$0xff]
      %v1000 = vld [vmem:[%s818 + $0xf9] sm:$0xff]
      %v1001 = vld [vmem:[%s818 + $0x109] sm:$0xff]
      %v1002 = vld [vmem:[%s818 + $0x111] sm:$0xff]
      %v1003 = vld [vmem:[%s818 + $0x121] sm:$0xff]
      %v1004 = vld [vmem:[%s818 + $0x129] sm:$0xff]
      %v1005 = vld [vmem:[%s818 + $0x139] sm:$0xff]
      %v1006 = vld [vmem:[%s818 + $0x141] sm:$0xff]
      %v1007 = vld [vmem:[%s818 + $0x151] sm:$0xff]
      %v1008 = vld [vmem:[%s818 + $0x159] sm:$0xff]
      %v1009 = vld [vmem:[%s818 + $0x169] sm:$0xff]
      %v1010 = vld [vmem:[%s818 + $0x171] sm:$0xff]
      %v1011 = vld [vmem:[%s818 + $0x2] sm:$0xff]
      %v1012 = vld [vmem:[%s818 + $0xa] sm:$0xff]
      %v1013 = vld [vmem:[%s818 + $0x1a] sm:$0xff]
      %v1014 = vld [vmem:[%s818 + $0x22] sm:$0xff]
      %v1015 = vld [vmem:[%s818 + $0x32] sm:$0xff]
      %v1016 = vld [vmem:[%s818 + $0x3a] sm:$0xff]
      %v1017 = vld [vmem:[%s818 + $0x4a] sm:$0xff]
      %v1018 = vld [vmem:[%s818 + $0x52] sm:$0xff]
      %v1019 = vld [vmem:[%s818 + $0x62] sm:$0xff]
      %v1020 = vld [vmem:[%s818 + $0x6a] sm:$0xff]
      %v1021 = vld [vmem:[%s818 + $0x7a] sm:$0xff]
      %v1022 = vld [vmem:[%s818 + $0x82] sm:$0xff]
      %v1023 = vld [vmem:[%s818 + $0x92] sm:$0xff]
      %v1024 = vld [vmem:[%s818 + $0x9a] sm:$0xff]
      %v1025 = vld [vmem:[%s818 + $0xaa] sm:$0xff]
      %v1026 = vld [vmem:[%s818 + $0xb2] sm:$0xff]
      %v1027 = vld [vmem:[%s818 + $0xc2] sm:$0xff]
      %v1028 = vld [vmem:[%s818 + $0xca] sm:$0xff]
      %v1029 = vld [vmem:[%s818 + $0xda] sm:$0xff]
      %v1030 = vld [vmem:[%s818 + $0xe2] sm:$0xff]
      %v1031 = vld [vmem:[%s818 + $0xf2] sm:$0xff]
      %v1032 = vld [vmem:[%s818 + $0xfa] sm:$0xff]
      %v1033 = vld [vmem:[%s818 + $0x10a] sm:$0xff]
      %v1034 = vld [vmem:[%s818 + $0x112] sm:$0xff]
      %v1035 = vld [vmem:[%s818 + $0x122] sm:$0xff]
      %v1036 = vld [vmem:[%s818 + $0x12a] sm:$0xff]
      %v1037 = vld [vmem:[%s818 + $0x13a] sm:$0xff]
      %v1038 = vld [vmem:[%s818 + $0x142] sm:$0xff]
      %v1039 = vld [vmem:[%s818 + $0x152] sm:$0xff]
      %v1040 = vld [vmem:[%s818 + $0x15a] sm:$0xff]
      %v1041 = vld [vmem:[%s818 + $0x16a] sm:$0xff]
      %v1042 = vld [vmem:[%s818 + $0x172] sm:$0xff]
      %s1043 = scalar_lea.vmem [#allocation2], 48
      %v1044 = vld [vmem:[%s1043] sm:$0xff]
      %v1045 = vld [vmem:[%s1043 + $0x8] sm:$0xff]
      %v1046 = vld [vmem:[%s1043 + $0x18] sm:$0xff]
      %v1047 = vld [vmem:[%s1043 + $0x20] sm:$0xff]
      %v1048 = vld [vmem:[%s1043 + $0x30] sm:$0xff]
      %v1049 = vld [vmem:[%s1043 + $0x38] sm:$0xff]
      %v1050 = vld [vmem:[%s1043 + $0x48] sm:$0xff]
      %v1051 = vld [vmem:[%s1043 + $0x50] sm:$0xff]
      %v1052 = vld [vmem:[%s1043 + $0x60] sm:$0xff]
      %v1053 = vld [vmem:[%s1043 + $0x68] sm:$0xff]
      %v1054 = vld [vmem:[%s1043 + $0x78] sm:$0xff]
      %v1055 = vld [vmem:[%s1043 + $0x80] sm:$0xff]
      %v1056 = vld [vmem:[%s1043 + $0x90] sm:$0xff]
      %v1057 = vld [vmem:[%s1043 + $0x98] sm:$0xff]
      %v1058 = vld [vmem:[%s1043 + $0xa8] sm:$0xff]
      %v1059 = vld [vmem:[%s1043 + $0xb0] sm:$0xff]
      %v1060 = vld [vmem:[%s1043 + $0xc0] sm:$0xff]
      %v1061 = vld [vmem:[%s1043 + $0xc8] sm:$0xff]
      %v1062 = vld [vmem:[%s1043 + $0xd8] sm:$0xff]
      %v1063 = vld [vmem:[%s1043 + $0xe0] sm:$0xff]
      %v1064 = vld [vmem:[%s1043 + $0xf0] sm:$0xff]
      %v1065 = vld [vmem:[%s1043 + $0xf8] sm:$0xff]
      %v1066 = vld [vmem:[%s1043 + $0x108] sm:$0xff]
      %v1067 = vld [vmem:[%s1043 + $0x110] sm:$0xff]
      %v1068 = vld [vmem:[%s1043 + $0x120] sm:$0xff]
      %v1069 = vld [vmem:[%s1043 + $0x128] sm:$0xff]
      %v1070 = vld [vmem:[%s1043 + $0x138] sm:$0xff]
      %v1071 = vld [vmem:[%s1043 + $0x140] sm:$0xff]
      %v1072 = vld [vmem:[%s1043 + $0x150] sm:$0xff]
      %v1073 = vld [vmem:[%s1043 + $0x158] sm:$0xff]
      %v1074 = vld [vmem:[%s1043 + $0x168] sm:$0xff]
      %v1075 = vld [vmem:[%s1043 + $0x170] sm:$0xff]
      %v1076 = vld [vmem:[%s1043 + $0x1] sm:$0xff]
      %v1077 = vld [vmem:[%s1043 + $0x9] sm:$0xff]
      %v1078 = vld [vmem:[%s1043 + $0x19] sm:$0xff]
      %v1079 = vld [vmem:[%s1043 + $0x21] sm:$0xff]
      %v1080 = vld [vmem:[%s1043 + $0x31] sm:$0xff]
      %v1081 = vld [vmem:[%s1043 + $0x39] sm:$0xff]
      %v1082 = vld [vmem:[%s1043 + $0x49] sm:$0xff]
      %v1083 = vld [vmem:[%s1043 + $0x51] sm:$0xff]
      %v1084 = vld [vmem:[%s1043 + $0x61] sm:$0xff]
      %v1085 = vld [vmem:[%s1043 + $0x69] sm:$0xff]
      %v1086 = vld [vmem:[%s1043 + $0x79] sm:$0xff]
      %v1087 = vld [vmem:[%s1043 + $0x81] sm:$0xff]
      %v1088 = vld [vmem:[%s1043 + $0x91] sm:$0xff]
      %v1089 = vld [vmem:[%s1043 + $0x99] sm:$0xff]
      %v1090 = vld [vmem:[%s1043 + $0xa9] sm:$0xff]
      %v1091 = vld [vmem:[%s1043 + $0xb1] sm:$0xff]
      %v1092 = vld [vmem:[%s1043 + $0xc1] sm:$0xff]
      %v1093 = vld [vmem:[%s1043 + $0xc9] sm:$0xff]
      %v1094 = vld [vmem:[%s1043 + $0xd9] sm:$0xff]
      %v1095 = vld [vmem:[%s1043 + $0xe1] sm:$0xff]
      %v1096 = vld [vmem:[%s1043 + $0xf1] sm:$0xff]
      %v1097 = vld [vmem:[%s1043 + $0xf9] sm:$0xff]
      %v1098 = vld [vmem:[%s1043 + $0x109] sm:$0xff]
      %v1099 = vld [vmem:[%s1043 + $0x111] sm:$0xff]
      %v1100 = vld [vmem:[%s1043 + $0x121] sm:$0xff]
      %v1101 = vld [vmem:[%s1043 + $0x129] sm:$0xff]
      %v1102 = vld [vmem:[%s1043 + $0x139] sm:$0xff]
      %v1103 = vld [vmem:[%s1043 + $0x141] sm:$0xff]
      %v1104 = vld [vmem:[%s1043 + $0x151] sm:$0xff]
      %v1105 = vld [vmem:[%s1043 + $0x159] sm:$0xff]
      %v1106 = vld [vmem:[%s1043 + $0x169] sm:$0xff]
      %v1107 = vld [vmem:[%s1043 + $0x171] sm:$0xff]
      %v1108 = vld [vmem:[%s1043 + $0x2] sm:$0xff]
      %v1109 = vld [vmem:[%s1043 + $0xa] sm:$0xff]
      %v1110 = vld [vmem:[%s1043 + $0x1a] sm:$0xff]
      %v1111 = vld [vmem:[%s1043 + $0x22] sm:$0xff]
      %v1112 = vld [vmem:[%s1043 + $0x32] sm:$0xff]
      %v1113 = vld [vmem:[%s1043 + $0x3a] sm:$0xff]
      %v1114 = vld [vmem:[%s1043 + $0x4a] sm:$0xff]
      %v1115 = vld [vmem:[%s1043 + $0x52] sm:$0xff]
      %v1116 = vld [vmem:[%s1043 + $0x62] sm:$0xff]
      %v1117 = vld [vmem:[%s1043 + $0x6a] sm:$0xff]
      %v1118 = vld [vmem:[%s1043 + $0x7a] sm:$0xff]
      %v1119 = vld [vmem:[%s1043 + $0x82] sm:$0xff]
      %v1120 = vld [vmem:[%s1043 + $0x92] sm:$0xff]
      %v1121 = vld [vmem:[%s1043 + $0x9a] sm:$0xff]
      %v1122 = vld [vmem:[%s1043 + $0xaa] sm:$0xff]
      %v1123 = vld [vmem:[%s1043 + $0xb2] sm:$0xff]
      %v1124 = vld [vmem:[%s1043 + $0xc2] sm:$0xff]
      %v1125 = vld [vmem:[%s1043 + $0xca] sm:$0xff]
      %v1126 = vld [vmem:[%s1043 + $0xda] sm:$0xff]
      %v1127 = vld [vmem:[%s1043 + $0xe2] sm:$0xff]
      %v1128 = vld [vmem:[%s1043 + $0xf2] sm:$0xff]
      %v1129 = vld [vmem:[%s1043 + $0xfa] sm:$0xff]
      %v1130 = vld [vmem:[%s1043 + $0x10a] sm:$0xff]
      %v1131 = vld [vmem:[%s1043 + $0x112] sm:$0xff]
      %v1132 = vld [vmem:[%s1043 + $0x122] sm:$0xff]
      %v1133 = vld [vmem:[%s1043 + $0x12a] sm:$0xff]
      %v1134 = vld [vmem:[%s1043 + $0x13a] sm:$0xff]
      %v1135 = vld [vmem:[%s1043 + $0x142] sm:$0xff]
      %v1136 = vld [vmem:[%s1043 + $0x152] sm:$0xff]
      %v1137 = vld [vmem:[%s1043 + $0x15a] sm:$0xff]
      %v1138 = vld [vmem:[%s1043 + $0x16a] sm:$0xff]
      %v1139 = vld [vmem:[%s1043 + $0x172] sm:$0xff]
      %1172 = vrot.lane.b32.xlu0 %v883, 8
      %v1173 = vpop.permute.xlu0 %1172
      %1174 = vrot.lane.b32.xlu0 %v884, 8
      %v1175 = vpop.permute.xlu0 %1174
      %1176 = vrot.lane.b32.xlu0 %v885, 8
      %v1177 = vpop.permute.xlu0 %1176
      %1178 = vrot.lane.b32.xlu0 %v886, 8
      %v1179 = vpop.permute.xlu0 %1178
      %1180 = vrot.lane.b32.xlu0 %v887, 8
      %v1181 = vpop.permute.xlu0 %1180
      %1182 = vrot.lane.b32.xlu0 %v888, 8
      %v1183 = vpop.permute.xlu0 %1182
      %1184 = vrot.lane.b32.xlu0 %v889, 8
      %v1185 = vpop.permute.xlu0 %1184
      %1186 = vrot.lane.b32.xlu0 %v890, 8
      %v1187 = vpop.permute.xlu0 %1186
      %1188 = vrot.lane.b32.xlu0 %v891, 8
      %v1189 = vpop.permute.xlu0 %1188
      %1190 = vrot.lane.b32.xlu0 %v892, 8
      %v1191 = vpop.permute.xlu0 %1190
      %1192 = vrot.lane.b32.xlu0 %v893, 8
      %v1193 = vpop.permute.xlu0 %1192
      %1194 = vrot.lane.b32.xlu0 %v894, 8
      %v1195 = vpop.permute.xlu0 %1194
      %1196 = vrot.lane.b32.xlu0 %v895, 8
      %v1197 = vpop.permute.xlu0 %1196
      %1198 = vrot.lane.b32.xlu0 %v896, 8
      %v1199 = vpop.permute.xlu0 %1198
      %1200 = vrot.lane.b32.xlu0 %v897, 8
      %v1201 = vpop.permute.xlu0 %1200
      %1202 = vrot.lane.b32.xlu0 %v898, 8
      %v1203 = vpop.permute.xlu0 %1202
      %1204 = vrot.lane.b32.xlu0 %v899, 8
      %v1205 = vpop.permute.xlu0 %1204
      %1206 = vrot.lane.b32.xlu0 %v900, 8
      %v1207 = vpop.permute.xlu0 %1206
      %1208 = vrot.lane.b32.xlu0 %v901, 8
      %v1209 = vpop.permute.xlu0 %1208
      %1210 = vrot.lane.b32.xlu0 %v902, 8
      %v1211 = vpop.permute.xlu0 %1210
      %1212 = vrot.lane.b32.xlu0 %v903, 8
      %v1213 = vpop.permute.xlu0 %1212
      %1214 = vrot.lane.b32.xlu0 %v904, 8
      %v1215 = vpop.permute.xlu0 %1214
      %1216 = vrot.lane.b32.xlu0 %v905, 8
      %v1217 = vpop.permute.xlu0 %1216
      %1218 = vrot.lane.b32.xlu0 %v906, 8
      %v1219 = vpop.permute.xlu0 %1218
      %1220 = vrot.lane.b32.xlu0 %v907, 8
      %v1221 = vpop.permute.xlu0 %1220
      %1222 = vrot.lane.b32.xlu0 %v908, 8
      %v1223 = vpop.permute.xlu0 %1222
      %1224 = vrot.lane.b32.xlu0 %v909, 8
      %v1225 = vpop.permute.xlu0 %1224
      %1226 = vrot.lane.b32.xlu0 %v910, 8
      %v1227 = vpop.permute.xlu0 %1226
      %1228 = vrot.lane.b32.xlu0 %v911, 8
      %v1229 = vpop.permute.xlu0 %1228
      %1230 = vrot.lane.b32.xlu0 %v912, 8
      %v1231 = vpop.permute.xlu0 %1230
      %1232 = vrot.lane.b32.xlu0 %v913, 8
      %v1233 = vpop.permute.xlu0 %1232
      %1234 = vrot.lane.b32.xlu0 %v914, 8
      %v1235 = vpop.permute.xlu0 %1234
      %1300 = vrot.lane.b32.xlu0 %v915, 16
      %v1301 = vpop.permute.xlu0 %1300
      %1302 = vrot.lane.b32.xlu0 %v916, 16
      %v1303 = vpop.permute.xlu0 %1302
      %1304 = vrot.lane.b32.xlu0 %v917, 16
      %v1305 = vpop.permute.xlu0 %1304
      %1306 = vrot.lane.b32.xlu0 %v918, 16
      %v1307 = vpop.permute.xlu0 %1306
      %1308 = vrot.lane.b32.xlu0 %v919, 16
      %v1309 = vpop.permute.xlu0 %1308
      %1310 = vrot.lane.b32.xlu0 %v920, 16
      %v1311 = vpop.permute.xlu0 %1310
      %1312 = vrot.lane.b32.xlu0 %v921, 16
      %v1313 = vpop.permute.xlu0 %1312
      %1314 = vrot.lane.b32.xlu0 %v922, 16
      %v1315 = vpop.permute.xlu0 %1314
      %1316 = vrot.lane.b32.xlu0 %v923, 16
      %v1317 = vpop.permute.xlu0 %1316
      %1318 = vrot.lane.b32.xlu0 %v924, 16
      %v1319 = vpop.permute.xlu0 %1318
      %1320 = vrot.lane.b32.xlu0 %v925, 16
      %v1321 = vpop.permute.xlu0 %1320
      %1322 = vrot.lane.b32.xlu0 %v926, 16
      %v1323 = vpop.permute.xlu0 %1322
      %1324 = vrot.lane.b32.xlu0 %v927, 16
      %v1325 = vpop.permute.xlu0 %1324
      %1326 = vrot.lane.b32.xlu0 %v928, 16
      %v1327 = vpop.permute.xlu0 %1326
      %1328 = vrot.lane.b32.xlu0 %v929, 16
      %v1329 = vpop.permute.xlu0 %1328
      %1330 = vrot.lane.b32.xlu0 %v930, 16
      %v1331 = vpop.permute.xlu0 %1330
      %1332 = vrot.lane.b32.xlu0 %v931, 16
      %v1333 = vpop.permute.xlu0 %1332
      %1334 = vrot.lane.b32.xlu0 %v932, 16
      %v1335 = vpop.permute.xlu0 %1334
      %1336 = vrot.lane.b32.xlu0 %v933, 16
      %v1337 = vpop.permute.xlu0 %1336
      %1338 = vrot.lane.b32.xlu0 %v934, 16
      %v1339 = vpop.permute.xlu0 %1338
      %1340 = vrot.lane.b32.xlu0 %v935, 16
      %v1341 = vpop.permute.xlu0 %1340
      %1342 = vrot.lane.b32.xlu0 %v936, 16
      %v1343 = vpop.permute.xlu0 %1342
      %1344 = vrot.lane.b32.xlu0 %v937, 16
      %v1345 = vpop.permute.xlu0 %1344
      %1346 = vrot.lane.b32.xlu0 %v938, 16
      %v1347 = vpop.permute.xlu0 %1346
      %1348 = vrot.lane.b32.xlu0 %v939, 16
      %v1349 = vpop.permute.xlu0 %1348
      %1350 = vrot.lane.b32.xlu0 %v940, 16
      %v1351 = vpop.permute.xlu0 %1350
      %1352 = vrot.lane.b32.xlu0 %v941, 16
      %v1353 = vpop.permute.xlu0 %1352
      %1354 = vrot.lane.b32.xlu0 %v942, 16
      %v1355 = vpop.permute.xlu0 %1354
      %1356 = vrot.lane.b32.xlu0 %v943, 16
      %v1357 = vpop.permute.xlu0 %1356
      %1358 = vrot.lane.b32.xlu0 %v944, 16
      %v1359 = vpop.permute.xlu0 %1358
      %1360 = vrot.lane.b32.xlu0 %v945, 16
      %v1361 = vpop.permute.xlu0 %1360
      %1362 = vrot.lane.b32.xlu0 %v946, 16
      %v1363 = vpop.permute.xlu0 %1362
      %1428 = vrot.lane.b32.xlu0 %v947, 24
      %v1429 = vpop.permute.xlu0 %1428
      %1430 = vrot.lane.b32.xlu0 %v948, 24
      %v1431 = vpop.permute.xlu0 %1430
      %1432 = vrot.lane.b32.xlu0 %v949, 24
      %v1433 = vpop.permute.xlu0 %1432
      %1434 = vrot.lane.b32.xlu0 %v950, 24
      %v1435 = vpop.permute.xlu0 %1434
      %1436 = vrot.lane.b32.xlu0 %v951, 24
      %v1437 = vpop.permute.xlu0 %1436
      %1438 = vrot.lane.b32.xlu0 %v952, 24
      %v1439 = vpop.permute.xlu0 %1438
      %1440 = vrot.lane.b32.xlu0 %v953, 24
      %v1441 = vpop.permute.xlu0 %1440
      %1442 = vrot.lane.b32.xlu0 %v954, 24
      %v1443 = vpop.permute.xlu0 %1442
      %1444 = vrot.lane.b32.xlu0 %v955, 24
      %v1445 = vpop.permute.xlu0 %1444
      %1446 = vrot.lane.b32.xlu0 %v956, 24
      %v1447 = vpop.permute.xlu0 %1446
      %1448 = vrot.lane.b32.xlu0 %v957, 24
      %v1449 = vpop.permute.xlu0 %1448
      %1450 = vrot.lane.b32.xlu0 %v958, 24
      %v1451 = vpop.permute.xlu0 %1450
      %1452 = vrot.lane.b32.xlu0 %v959, 24
      %v1453 = vpop.permute.xlu0 %1452
      %1454 = vrot.lane.b32.xlu0 %v960, 24
      %v1455 = vpop.permute.xlu0 %1454
      %1456 = vrot.lane.b32.xlu0 %v961, 24
      %v1457 = vpop.permute.xlu0 %1456
      %1458 = vrot.lane.b32.xlu0 %v962, 24
      %v1459 = vpop.permute.xlu0 %1458
      %1460 = vrot.lane.b32.xlu0 %v963, 24
      %v1461 = vpop.permute.xlu0 %1460
      %1462 = vrot.lane.b32.xlu0 %v964, 24
      %v1463 = vpop.permute.xlu0 %1462
      %1464 = vrot.lane.b32.xlu0 %v965, 24
      %v1465 = vpop.permute.xlu0 %1464
      %1466 = vrot.lane.b32.xlu0 %v966, 24
      %v1467 = vpop.permute.xlu0 %1466
      %1468 = vrot.lane.b32.xlu0 %v967, 24
      %v1469 = vpop.permute.xlu0 %1468
      %1470 = vrot.lane.b32.xlu0 %v968, 24
      %v1471 = vpop.permute.xlu0 %1470
      %1472 = vrot.lane.b32.xlu0 %v969, 24
      %v1473 = vpop.permute.xlu0 %1472
      %1474 = vrot.lane.b32.xlu0 %v970, 24
      %v1475 = vpop.permute.xlu0 %1474
      %1476 = vrot.lane.b32.xlu0 %v971, 24
      %v1477 = vpop.permute.xlu0 %1476
      %1478 = vrot.lane.b32.xlu0 %v972, 24
      %v1479 = vpop.permute.xlu0 %1478
      %1480 = vrot.lane.b32.xlu0 %v973, 24
      %v1481 = vpop.permute.xlu0 %1480
      %1482 = vrot.lane.b32.xlu0 %v974, 24
      %v1483 = vpop.permute.xlu0 %1482
      %1484 = vrot.lane.b32.xlu0 %v975, 24
      %v1485 = vpop.permute.xlu0 %1484
      %1486 = vrot.lane.b32.xlu0 %v976, 24
      %v1487 = vpop.permute.xlu0 %1486
      %1488 = vrot.lane.b32.xlu0 %v977, 24
      %v1489 = vpop.permute.xlu0 %1488
      %1490 = vrot.lane.b32.xlu0 %v978, 24
      %v1491 = vpop.permute.xlu0 %1490
      %1556 = vrot.lane.b32.xlu0 %v979, 32
      %v1557 = vpop.permute.xlu0 %1556
      %1558 = vrot.lane.b32.xlu0 %v980, 32
      %v1559 = vpop.permute.xlu0 %1558
      %1560 = vrot.lane.b32.xlu0 %v981, 32
      %v1561 = vpop.permute.xlu0 %1560
      %1562 = vrot.lane.b32.xlu0 %v982, 32
      %v1563 = vpop.permute.xlu0 %1562
      %1564 = vrot.lane.b32.xlu0 %v983, 32
      %v1565 = vpop.permute.xlu0 %1564
      %1566 = vrot.lane.b32.xlu0 %v984, 32
      %v1567 = vpop.permute.xlu0 %1566
      %1568 = vrot.lane.b32.xlu0 %v985, 32
      %v1569 = vpop.permute.xlu0 %1568
      %1570 = vrot.lane.b32.xlu0 %v986, 32
      %v1571 = vpop.permute.xlu0 %1570
      %1572 = vrot.lane.b32.xlu0 %v987, 32
      %v1573 = vpop.permute.xlu0 %1572
      %1574 = vrot.lane.b32.xlu0 %v988, 32
      %v1575 = vpop.permute.xlu0 %1574
      %1576 = vrot.lane.b32.xlu0 %v989, 32
      %v1577 = vpop.permute.xlu0 %1576
      %1578 = vrot.lane.b32.xlu0 %v990, 32
      %v1579 = vpop.permute.xlu0 %1578
      %1580 = vrot.lane.b32.xlu0 %v991, 32
      %v1581 = vpop.permute.xlu0 %1580
      %1582 = vrot.lane.b32.xlu0 %v992, 32
      %v1583 = vpop.permute.xlu0 %1582
      %1584 = vrot.lane.b32.xlu0 %v993, 32
      %v1585 = vpop.permute.xlu0 %1584
      %1586 = vrot.lane.b32.xlu0 %v994, 32
      %v1587 = vpop.permute.xlu0 %1586
      %1588 = vrot.lane.b32.xlu0 %v995, 32
      %v1589 = vpop.permute.xlu0 %1588
      %1590 = vrot.lane.b32.xlu0 %v996, 32
      %v1591 = vpop.permute.xlu0 %1590
      %1592 = vrot.lane.b32.xlu0 %v997, 32
      %v1593 = vpop.permute.xlu0 %1592
      %1594 = vrot.lane.b32.xlu0 %v998, 32
      %v1595 = vpop.permute.xlu0 %1594
      %1596 = vrot.lane.b32.xlu0 %v999, 32
      %v1597 = vpop.permute.xlu0 %1596
      %1598 = vrot.lane.b32.xlu0 %v1000, 32
      %v1599 = vpop.permute.xlu0 %1598
      %1600 = vrot.lane.b32.xlu0 %v1001, 32
      %v1601 = vpop.permute.xlu0 %1600
      %1602 = vrot.lane.b32.xlu0 %v1002, 32
      %v1603 = vpop.permute.xlu0 %1602
      %1604 = vrot.lane.b32.xlu0 %v1003, 32
      %v1605 = vpop.permute.xlu0 %1604
      %1606 = vrot.lane.b32.xlu0 %v1004, 32
      %v1607 = vpop.permute.xlu0 %1606
      %1608 = vrot.lane.b32.xlu0 %v1005, 32
      %v1609 = vpop.permute.xlu0 %1608
      %1610 = vrot.lane.b32.xlu0 %v1006, 32
      %v1611 = vpop.permute.xlu0 %1610
      %1612 = vrot.lane.b32.xlu0 %v1007, 32
      %v1613 = vpop.permute.xlu0 %1612
      %1614 = vrot.lane.b32.xlu0 %v1008, 32
      %v1615 = vpop.permute.xlu0 %1614
      %1616 = vrot.lane.b32.xlu0 %v1009, 32
      %v1617 = vpop.permute.xlu0 %1616
      %1618 = vrot.lane.b32.xlu0 %v1010, 32
      %v1619 = vpop.permute.xlu0 %1618
      %1684 = vrot.lane.b32.xlu0 %v1011, 40
      %v1685 = vpop.permute.xlu0 %1684
      %1686 = vrot.lane.b32.xlu0 %v1012, 40
      %v1687 = vpop.permute.xlu0 %1686
      %1688 = vrot.lane.b32.xlu0 %v1013, 40
      %v1689 = vpop.permute.xlu0 %1688
      %1690 = vrot.lane.b32.xlu0 %v1014, 40
      %v1691 = vpop.permute.xlu0 %1690
      %1692 = vrot.lane.b32.xlu0 %v1015, 40
      %v1693 = vpop.permute.xlu0 %1692
      %1694 = vrot.lane.b32.xlu0 %v1016, 40
      %v1695 = vpop.permute.xlu0 %1694
      %1696 = vrot.lane.b32.xlu0 %v1017, 40
      %v1697 = vpop.permute.xlu0 %1696
      %1698 = vrot.lane.b32.xlu0 %v1018, 40
      %v1699 = vpop.permute.xlu0 %1698
      %1700 = vrot.lane.b32.xlu0 %v1019, 40
      %v1701 = vpop.permute.xlu0 %1700
      %1702 = vrot.lane.b32.xlu0 %v1020, 40
      %v1703 = vpop.permute.xlu0 %1702
      %1704 = vrot.lane.b32.xlu0 %v1021, 40
      %v1705 = vpop.permute.xlu0 %1704
      %1706 = vrot.lane.b32.xlu0 %v1022, 40
      %v1707 = vpop.permute.xlu0 %1706
      %1708 = vrot.lane.b32.xlu0 %v1023, 40
      %v1709 = vpop.permute.xlu0 %1708
      %1710 = vrot.lane.b32.xlu0 %v1024, 40
      %v1711 = vpop.permute.xlu0 %1710
      %1712 = vrot.lane.b32.xlu0 %v1025, 40
      %v1713 = vpop.permute.xlu0 %1712
      %1714 = vrot.lane.b32.xlu0 %v1026, 40
      %v1715 = vpop.permute.xlu0 %1714
      %1716 = vrot.lane.b32.xlu0 %v1027, 40
      %v1717 = vpop.permute.xlu0 %1716
      %1718 = vrot.lane.b32.xlu0 %v1028, 40
      %v1719 = vpop.permute.xlu0 %1718
      %1720 = vrot.lane.b32.xlu0 %v1029, 40
      %v1721 = vpop.permute.xlu0 %1720
      %1722 = vrot.lane.b32.xlu0 %v1030, 40
      %v1723 = vpop.permute.xlu0 %1722
      %1724 = vrot.lane.b32.xlu0 %v1031, 40
      %v1725 = vpop.permute.xlu0 %1724
      %1726 = vrot.lane.b32.xlu0 %v1032, 40
      %v1727 = vpop.permute.xlu0 %1726
      %1728 = vrot.lane.b32.xlu0 %v1033, 40
      %v1729 = vpop.permute.xlu0 %1728
      %1730 = vrot.lane.b32.xlu0 %v1034, 40
      %v1731 = vpop.permute.xlu0 %1730
      %1732 = vrot.lane.b32.xlu0 %v1035, 40
      %v1733 = vpop.permute.xlu0 %1732
      %1734 = vrot.lane.b32.xlu0 %v1036, 40
      %v1735 = vpop.permute.xlu0 %1734
      %1736 = vrot.lane.b32.xlu0 %v1037, 40
      %v1737 = vpop.permute.xlu0 %1736
      %1738 = vrot.lane.b32.xlu0 %v1038, 40
      %v1739 = vpop.permute.xlu0 %1738
      %1740 = vrot.lane.b32.xlu0 %v1039, 40
      %v1741 = vpop.permute.xlu0 %1740
      %1742 = vrot.lane.b32.xlu0 %v1040, 40
      %v1743 = vpop.permute.xlu0 %1742
      %1744 = vrot.lane.b32.xlu0 %v1041, 40
      %v1745 = vpop.permute.xlu0 %1744
      %1746 = vrot.lane.b32.xlu0 %v1042, 40
      %v1747 = vpop.permute.xlu0 %1746
      %1812 = vrot.lane.b32.xlu0 %v1044, 48
      %v1813 = vpop.permute.xlu0 %1812
      %1814 = vrot.lane.b32.xlu0 %v1045, 48
      %v1815 = vpop.permute.xlu0 %1814
      %1816 = vrot.lane.b32.xlu0 %v1046, 48
      %v1817 = vpop.permute.xlu0 %1816
      %1818 = vrot.lane.b32.xlu0 %v1047, 48
      %v1819 = vpop.permute.xlu0 %1818
      %1820 = vrot.lane.b32.xlu0 %v1048, 48
      %v1821 = vpop.permute.xlu0 %1820
      %1822 = vrot.lane.b32.xlu0 %v1049, 48
      %v1823 = vpop.permute.xlu0 %1822
      %1824 = vrot.lane.b32.xlu0 %v1050, 48
      %v1825 = vpop.permute.xlu0 %1824
      %1826 = vrot.lane.b32.xlu0 %v1051, 48
      %v1827 = vpop.permute.xlu0 %1826
      %1828 = vrot.lane.b32.xlu0 %v1052, 48
      %v1829 = vpop.permute.xlu0 %1828
      %1830 = vrot.lane.b32.xlu0 %v1053, 48
      %v1831 = vpop.permute.xlu0 %1830
      %1832 = vrot.lane.b32.xlu0 %v1054, 48
      %v1833 = vpop.permute.xlu0 %1832
      %1834 = vrot.lane.b32.xlu0 %v1055, 48
      %v1835 = vpop.permute.xlu0 %1834
      %1836 = vrot.lane.b32.xlu0 %v1056, 48
      %v1837 = vpop.permute.xlu0 %1836
      %1838 = vrot.lane.b32.xlu0 %v1057, 48
      %v1839 = vpop.permute.xlu0 %1838
      %1840 = vrot.lane.b32.xlu0 %v1058, 48
      %v1841 = vpop.permute.xlu0 %1840
      %1842 = vrot.lane.b32.xlu0 %v1059, 48
      %v1843 = vpop.permute.xlu0 %1842
      %1844 = vrot.lane.b32.xlu0 %v1060, 48
      %v1845 = vpop.permute.xlu0 %1844
      %1846 = vrot.lane.b32.xlu0 %v1061, 48
      %v1847 = vpop.permute.xlu0 %1846
      %1848 = vrot.lane.b32.xlu0 %v1062, 48
      %v1849 = vpop.permute.xlu0 %1848
      %1850 = vrot.lane.b32.xlu0 %v1063, 48
      %v1851 = vpop.permute.xlu0 %1850
      %1852 = vrot.lane.b32.xlu0 %v1064, 48
      %v1853 = vpop.permute.xlu0 %1852
      %1854 = vrot.lane.b32.xlu0 %v1065, 48
      %v1855 = vpop.permute.xlu0 %1854
      %1856 = vrot.lane.b32.xlu0 %v1066, 48
      %v1857 = vpop.permute.xlu0 %1856
      %1858 = vrot.lane.b32.xlu0 %v1067, 48
      %v1859 = vpop.permute.xlu0 %1858
      %1860 = vrot.lane.b32.xlu0 %v1068, 48
      %v1861 = vpop.permute.xlu0 %1860
      %1862 = vrot.lane.b32.xlu0 %v1069, 48
      %v1863 = vpop.permute.xlu0 %1862
      %1864 = vrot.lane.b32.xlu0 %v1070, 48
      %v1865 = vpop.permute.xlu0 %1864
      %1866 = vrot.lane.b32.xlu0 %v1071, 48
      %v1867 = vpop.permute.xlu0 %1866
      %1868 = vrot.lane.b32.xlu0 %v1072, 48
      %v1869 = vpop.permute.xlu0 %1868
      %1870 = vrot.lane.b32.xlu0 %v1073, 48
      %v1871 = vpop.permute.xlu0 %1870
      %1872 = vrot.lane.b32.xlu0 %v1074, 48
      %v1873 = vpop.permute.xlu0 %1872
      %1874 = vrot.lane.b32.xlu0 %v1075, 48
      %v1875 = vpop.permute.xlu0 %1874
      %1940 = vrot.lane.b32.xlu0 %v1076, 56
      %v1941 = vpop.permute.xlu0 %1940
      %1942 = vrot.lane.b32.xlu0 %v1077, 56
      %v1943 = vpop.permute.xlu0 %1942
      %1944 = vrot.lane.b32.xlu0 %v1078, 56
      %v1945 = vpop.permute.xlu0 %1944
      %1946 = vrot.lane.b32.xlu0 %v1079, 56
      %v1947 = vpop.permute.xlu0 %1946
      %1948 = vrot.lane.b32.xlu0 %v1080, 56
      %v1949 = vpop.permute.xlu0 %1948
      %1950 = vrot.lane.b32.xlu0 %v1081, 56
      %v1951 = vpop.permute.xlu0 %1950
      %1952 = vrot.lane.b32.xlu0 %v1082, 56
      %v1953 = vpop.permute.xlu0 %1952
      %1954 = vrot.lane.b32.xlu0 %v1083, 56
      %v1955 = vpop.permute.xlu0 %1954
      %1956 = vrot.lane.b32.xlu0 %v1084, 56
      %v1957 = vpop.permute.xlu0 %1956
      %1958 = vrot.lane.b32.xlu0 %v1085, 56
      %v1959 = vpop.permute.xlu0 %1958
      %1960 = vrot.lane.b32.xlu0 %v1086, 56
      %v1961 = vpop.permute.xlu0 %1960
      %1962 = vrot.lane.b32.xlu0 %v1087, 56
      %v1963 = vpop.permute.xlu0 %1962
      %1964 = vrot.lane.b32.xlu0 %v1088, 56
      %v1965 = vpop.permute.xlu0 %1964
      %1966 = vrot.lane.b32.xlu0 %v1089, 56
      %v1967 = vpop.permute.xlu0 %1966
      %1968 = vrot.lane.b32.xlu0 %v1090, 56
      %v1969 = vpop.permute.xlu0 %1968
      %1970 = vrot.lane.b32.xlu0 %v1091, 56
      %v1971 = vpop.permute.xlu0 %1970
      %1972 = vrot.lane.b32.xlu0 %v1092, 56
      %v1973 = vpop.permute.xlu0 %1972
      %1974 = vrot.lane.b32.xlu0 %v1093, 56
      %v1975 = vpop.permute.xlu0 %1974
      %1976 = vrot.lane.b32.xlu0 %v1094, 56
      %v1977 = vpop.permute.xlu0 %1976
      %1978 = vrot.lane.b32.xlu0 %v1095, 56
      %v1979 = vpop.permute.xlu0 %1978
      %1980 = vrot.lane.b32.xlu0 %v1096, 56
      %v1981 = vpop.permute.xlu0 %1980
      %1982 = vrot.lane.b32.xlu0 %v1097, 56
      %v1983 = vpop.permute.xlu0 %1982
      %1984 = vrot.lane.b32.xlu0 %v1098, 56
      %v1985 = vpop.permute.xlu0 %1984
      %1986 = vrot.lane.b32.xlu0 %v1099, 56
      %v1987 = vpop.permute.xlu0 %1986
      %1988 = vrot.lane.b32.xlu0 %v1100, 56
      %v1989 = vpop.permute.xlu0 %1988
      %1990 = vrot.lane.b32.xlu0 %v1101, 56
      %v1991 = vpop.permute.xlu0 %1990
      %1992 = vrot.lane.b32.xlu0 %v1102, 56
      %v1993 = vpop.permute.xlu0 %1992
      %1994 = vrot.lane.b32.xlu0 %v1103, 56
      %v1995 = vpop.permute.xlu0 %1994
      %1996 = vrot.lane.b32.xlu0 %v1104, 56
      %v1997 = vpop.permute.xlu0 %1996
      %1998 = vrot.lane.b32.xlu0 %v1105, 56
      %v1999 = vpop.permute.xlu0 %1998
      %2000 = vrot.lane.b32.xlu0 %v1106, 56
      %v2001 = vpop.permute.xlu0 %2000
      %2002 = vrot.lane.b32.xlu0 %v1107, 56
      %v2003 = vpop.permute.xlu0 %2002
      %2068 = vrot.lane.b32.xlu0 %v1108, 64
      %v2069 = vpop.permute.xlu0 %2068
      %2070 = vrot.lane.b32.xlu0 %v1109, 64
      %v2071 = vpop.permute.xlu0 %2070
      %2072 = vrot.lane.b32.xlu0 %v1110, 64
      %v2073 = vpop.permute.xlu0 %2072
      %2074 = vrot.lane.b32.xlu0 %v1111, 64
      %v2075 = vpop.permute.xlu0 %2074
      %2076 = vrot.lane.b32.xlu0 %v1112, 64
      %v2077 = vpop.permute.xlu0 %2076
      %2078 = vrot.lane.b32.xlu0 %v1113, 64
      %v2079 = vpop.permute.xlu0 %2078
      %2080 = vrot.lane.b32.xlu0 %v1114, 64
      %v2081 = vpop.permute.xlu0 %2080
      %2082 = vrot.lane.b32.xlu0 %v1115, 64
      %v2083 = vpop.permute.xlu0 %2082
      %2084 = vrot.lane.b32.xlu0 %v1116, 64
      %v2085 = vpop.permute.xlu0 %2084
      %2086 = vrot.lane.b32.xlu0 %v1117, 64
      %v2087 = vpop.permute.xlu0 %2086
      %2088 = vrot.lane.b32.xlu0 %v1118, 64
      %v2089 = vpop.permute.xlu0 %2088
      %2090 = vrot.lane.b32.xlu0 %v1119, 64
      %v2091 = vpop.permute.xlu0 %2090
      %2092 = vrot.lane.b32.xlu0 %v1120, 64
      %v2093 = vpop.permute.xlu0 %2092
      %2094 = vrot.lane.b32.xlu0 %v1121, 64
      %v2095 = vpop.permute.xlu0 %2094
      %2096 = vrot.lane.b32.xlu0 %v1122, 64
      %v2097 = vpop.permute.xlu0 %2096
      %2098 = vrot.lane.b32.xlu0 %v1123, 64
      %v2099 = vpop.permute.xlu0 %2098
      %2100 = vrot.lane.b32.xlu0 %v1124, 64
      %v2101 = vpop.permute.xlu0 %2100
      %2102 = vrot.lane.b32.xlu0 %v1125, 64
      %v2103 = vpop.permute.xlu0 %2102
      %2104 = vrot.lane.b32.xlu0 %v1126, 64
      %v2105 = vpop.permute.xlu0 %2104
      %2106 = vrot.lane.b32.xlu0 %v1127, 64
      %v2107 = vpop.permute.xlu0 %2106
      %2108 = vrot.lane.b32.xlu0 %v1128, 64
      %v2109 = vpop.permute.xlu0 %2108
      %2110 = vrot.lane.b32.xlu0 %v1129, 64
      %v2111 = vpop.permute.xlu0 %2110
      %2112 = vrot.lane.b32.xlu0 %v1130, 64
      %v2113 = vpop.permute.xlu0 %2112
      %2114 = vrot.lane.b32.xlu0 %v1131, 64
      %v2115 = vpop.permute.xlu0 %2114
      %2116 = vrot.lane.b32.xlu0 %v1132, 64
      %v2117 = vpop.permute.xlu0 %2116
      %2118 = vrot.lane.b32.xlu0 %v1133, 64
      %v2119 = vpop.permute.xlu0 %2118
      %2120 = vrot.lane.b32.xlu0 %v1134, 64
      %v2121 = vpop.permute.xlu0 %2120
      %2122 = vrot.lane.b32.xlu0 %v1135, 64
      %v2123 = vpop.permute.xlu0 %2122
      %2124 = vrot.lane.b32.xlu0 %v1136, 64
      %v2125 = vpop.permute.xlu0 %2124
      %2126 = vrot.lane.b32.xlu0 %v1137, 64
      %v2127 = vpop.permute.xlu0 %2126
      %2128 = vrot.lane.b32.xlu0 %v1138, 64
      %v2129 = vpop.permute.xlu0 %2128
      %2130 = vrot.lane.b32.xlu0 %v1139, 64
      %v2131 = vpop.permute.xlu0 %2130
      %v2164 = vsel %vm439, %v851, %v1173
      %v2165 = vsel %vm439, %v852, %v1175
      %v2166 = vsel %vm439, %v853, %v1177
      %v2167 = vsel %vm439, %v854, %v1179
      %v2168 = vsel %vm439, %v855, %v1181
      %v2169 = vsel %vm439, %v856, %v1183
      %v2170 = vsel %vm439, %v857, %v1185
      %v2171 = vsel %vm439, %v858, %v1187
      %v2172 = vsel %vm439, %v859, %v1189
      %v2173 = vsel %vm439, %v860, %v1191
      %v2174 = vsel %vm439, %v861, %v1193
      %v2175 = vsel %vm439, %v862, %v1195
      %v2176 = vsel %vm439, %v863, %v1197
      %v2177 = vsel %vm439, %v864, %v1199
      %v2178 = vsel %vm439, %v865, %v1201
      %v2179 = vsel %vm439, %v866, %v1203
      %v2180 = vsel %vm439, %v867, %v1205
      %v2181 = vsel %vm439, %v868, %v1207
      %v2182 = vsel %vm439, %v869, %v1209
      %v2183 = vsel %vm439, %v870, %v1211
      %v2184 = vsel %vm439, %v871, %v1213
      %v2185 = vsel %vm439, %v872, %v1215
      %v2186 = vsel %vm439, %v873, %v1217
      %v2187 = vsel %vm439, %v874, %v1219
      %v2188 = vsel %vm439, %v875, %v1221
      %v2189 = vsel %vm439, %v876, %v1223
      %v2190 = vsel %vm439, %v877, %v1225
      %v2191 = vsel %vm439, %v878, %v1227
      %v2192 = vsel %vm439, %v879, %v1229
      %v2193 = vsel %vm439, %v880, %v1231
      %v2194 = vsel %vm439, %v881, %v1233
      %v2195 = vsel %vm439, %v882, %v1235
      %vm2196 = vcmask 130048
      %v2197 = vsel %vm2196, %v2164, %v1301
      %v2198 = vsel %vm2196, %v2165, %v1303
      %v2199 = vsel %vm2196, %v2166, %v1305
      %v2200 = vsel %vm2196, %v2167, %v1307
      %v2201 = vsel %vm2196, %v2168, %v1309
      %v2202 = vsel %vm2196, %v2169, %v1311
      %v2203 = vsel %vm2196, %v2170, %v1313
      %v2204 = vsel %vm2196, %v2171, %v1315
      %v2205 = vsel %vm2196, %v2172, %v1317
      %v2206 = vsel %vm2196, %v2173, %v1319
      %v2207 = vsel %vm2196, %v2174, %v1321
      %v2208 = vsel %vm2196, %v2175, %v1323
      %v2209 = vsel %vm2196, %v2176, %v1325
      %v2210 = vsel %vm2196, %v2177, %v1327
      %v2211 = vsel %vm2196, %v2178, %v1329
      %v2212 = vsel %vm2196, %v2179, %v1331
      %v2213 = vsel %vm2196, %v2180, %v1333
      %v2214 = vsel %vm2196, %v2181, %v1335
      %v2215 = vsel %vm2196, %v2182, %v1337
      %v2216 = vsel %vm2196, %v2183, %v1339
      %v2217 = vsel %vm2196, %v2184, %v1341
      %v2218 = vsel %vm2196, %v2185, %v1343
      %v2219 = vsel %vm2196, %v2186, %v1345
      %v2220 = vsel %vm2196, %v2187, %v1347
      %v2221 = vsel %vm2196, %v2188, %v1349
      %v2222 = vsel %vm2196, %v2189, %v1351
      %v2223 = vsel %vm2196, %v2190, %v1353
      %v2224 = vsel %vm2196, %v2191, %v1355
      %v2225 = vsel %vm2196, %v2192, %v1357
      %v2226 = vsel %vm2196, %v2193, %v1359
      %v2227 = vsel %vm2196, %v2194, %v1361
      %v2228 = vsel %vm2196, %v2195, %v1363
      %vm2229 = vcmask 195584
      %v2230 = vsel %vm2229, %v2197, %v1429
      %v2231 = vsel %vm2229, %v2198, %v1431
      %v2232 = vsel %vm2229, %v2199, %v1433
      %v2233 = vsel %vm2229, %v2200, %v1435
      %v2234 = vsel %vm2229, %v2201, %v1437
      %v2235 = vsel %vm2229, %v2202, %v1439
      %v2236 = vsel %vm2229, %v2203, %v1441
      %v2237 = vsel %vm2229, %v2204, %v1443
      %v2238 = vsel %vm2229, %v2205, %v1445
      %v2239 = vsel %vm2229, %v2206, %v1447
      %v2240 = vsel %vm2229, %v2207, %v1449
      %v2241 = vsel %vm2229, %v2208, %v1451
      %v2242 = vsel %vm2229, %v2209, %v1453
      %v2243 = vsel %vm2229, %v2210, %v1455
      %v2244 = vsel %vm2229, %v2211, %v1457
      %v2245 = vsel %vm2229, %v2212, %v1459
      %v2246 = vsel %vm2229, %v2213, %v1461
      %v2247 = vsel %vm2229, %v2214, %v1463
      %v2248 = vsel %vm2229, %v2215, %v1465
      %v2249 = vsel %vm2229, %v2216, %v1467
      %v2250 = vsel %vm2229, %v2217, %v1469
      %v2251 = vsel %vm2229, %v2218, %v1471
      %v2252 = vsel %vm2229, %v2219, %v1473
      %v2253 = vsel %vm2229, %v2220, %v1475
      %v2254 = vsel %vm2229, %v2221, %v1477
      %v2255 = vsel %vm2229, %v2222, %v1479
      %v2256 = vsel %vm2229, %v2223, %v1481
      %v2257 = vsel %vm2229, %v2224, %v1483
      %v2258 = vsel %vm2229, %v2225, %v1485
      %v2259 = vsel %vm2229, %v2226, %v1487
      %v2260 = vsel %vm2229, %v2227, %v1489
      %v2261 = vsel %vm2229, %v2228, %v1491
      %vm2262 = vcmask 261120
      %v2263 = vsel %vm2262, %v2230, %v1557
      %v2264 = vsel %vm2262, %v2231, %v1559
      %v2265 = vsel %vm2262, %v2232, %v1561
      %v2266 = vsel %vm2262, %v2233, %v1563
      %v2267 = vsel %vm2262, %v2234, %v1565
      %v2268 = vsel %vm2262, %v2235, %v1567
      %v2269 = vsel %vm2262, %v2236, %v1569
      %v2270 = vsel %vm2262, %v2237, %v1571
      %v2271 = vsel %vm2262, %v2238, %v1573
      %v2272 = vsel %vm2262, %v2239, %v1575
      %v2273 = vsel %vm2262, %v2240, %v1577
      %v2274 = vsel %vm2262, %v2241, %v1579
      %v2275 = vsel %vm2262, %v2242, %v1581
      %v2276 = vsel %vm2262, %v2243, %v1583
      %v2277 = vsel %vm2262, %v2244, %v1585
      %v2278 = vsel %vm2262, %v2245, %v1587
      %v2279 = vsel %vm2262, %v2246, %v1589
      %v2280 = vsel %vm2262, %v2247, %v1591
      %v2281 = vsel %vm2262, %v2248, %v1593
      %v2282 = vsel %vm2262, %v2249, %v1595
      %v2283 = vsel %vm2262, %v2250, %v1597
      %v2284 = vsel %vm2262, %v2251, %v1599
      %v2285 = vsel %vm2262, %v2252, %v1601
      %v2286 = vsel %vm2262, %v2253, %v1603
      %v2287 = vsel %vm2262, %v2254, %v1605
      %v2288 = vsel %vm2262, %v2255, %v1607
      %v2289 = vsel %vm2262, %v2256, %v1609
      %v2290 = vsel %vm2262, %v2257, %v1611
      %v2291 = vsel %vm2262, %v2258, %v1613
      %v2292 = vsel %vm2262, %v2259, %v1615
      %v2293 = vsel %vm2262, %v2260, %v1617
      %v2294 = vsel %vm2262, %v2261, %v1619
      %vm2295 = vcmask 326656
      %v2296 = vsel %vm2295, %v2263, %v1685
      %v2297 = vsel %vm2295, %v2264, %v1687
      %v2298 = vsel %vm2295, %v2265, %v1689
      %v2299 = vsel %vm2295, %v2266, %v1691
      %v2300 = vsel %vm2295, %v2267, %v1693
      %v2301 = vsel %vm2295, %v2268, %v1695
      %v2302 = vsel %vm2295, %v2269, %v1697
      %v2303 = vsel %vm2295, %v2270, %v1699
      %v2304 = vsel %vm2295, %v2271, %v1701
      %v2305 = vsel %vm2295, %v2272, %v1703
      %v2306 = vsel %vm2295, %v2273, %v1705
      %v2307 = vsel %vm2295, %v2274, %v1707
      %v2308 = vsel %vm2295, %v2275, %v1709
      %v2309 = vsel %vm2295, %v2276, %v1711
      %v2310 = vsel %vm2295, %v2277, %v1713
      %v2311 = vsel %vm2295, %v2278, %v1715
      %v2312 = vsel %vm2295, %v2279, %v1717
      %v2313 = vsel %vm2295, %v2280, %v1719
      %v2314 = vsel %vm2295, %v2281, %v1721
      %v2315 = vsel %vm2295, %v2282, %v1723
      %v2316 = vsel %vm2295, %v2283, %v1725
      %v2317 = vsel %vm2295, %v2284, %v1727
      %v2318 = vsel %vm2295, %v2285, %v1729
      %v2319 = vsel %vm2295, %v2286, %v1731
      %v2320 = vsel %vm2295, %v2287, %v1733
      %v2321 = vsel %vm2295, %v2288, %v1735
      %v2322 = vsel %vm2295, %v2289, %v1737
      %v2323 = vsel %vm2295, %v2290, %v1739
      %v2324 = vsel %vm2295, %v2291, %v1741
      %v2325 = vsel %vm2295, %v2292, %v1743
      %v2326 = vsel %vm2295, %v2293, %v1745
      %v2327 = vsel %vm2295, %v2294, %v1747
      %vm2328 = vcmask 392192
      %v2329 = vsel %vm2328, %v2296, %v1813
      %v2330 = vsel %vm2328, %v2297, %v1815
      %v2331 = vsel %vm2328, %v2298, %v1817
      %v2332 = vsel %vm2328, %v2299, %v1819
      %v2333 = vsel %vm2328, %v2300, %v1821
      %v2334 = vsel %vm2328, %v2301, %v1823
      %v2335 = vsel %vm2328, %v2302, %v1825
      %v2336 = vsel %vm2328, %v2303, %v1827
      %v2337 = vsel %vm2328, %v2304, %v1829
      %v2338 = vsel %vm2328, %v2305, %v1831
      %v2339 = vsel %vm2328, %v2306, %v1833
      %v2340 = vsel %vm2328, %v2307, %v1835
      %v2341 = vsel %vm2328, %v2308, %v1837
      %v2342 = vsel %vm2328, %v2309, %v1839
      %v2343 = vsel %vm2328, %v2310, %v1841
      %v2344 = vsel %vm2328, %v2311, %v1843
      %v2345 = vsel %vm2328, %v2312, %v1845
      %v2346 = vsel %vm2328, %v2313, %v1847
      %v2347 = vsel %vm2328, %v2314, %v1849
      %v2348 = vsel %vm2328, %v2315, %v1851
      %v2349 = vsel %vm2328, %v2316, %v1853
      %v2350 = vsel %vm2328, %v2317, %v1855
      %v2351 = vsel %vm2328, %v2318, %v1857
      %v2352 = vsel %vm2328, %v2319, %v1859
      %v2353 = vsel %vm2328, %v2320, %v1861
      %v2354 = vsel %vm2328, %v2321, %v1863
      %v2355 = vsel %vm2328, %v2322, %v1865
      %v2356 = vsel %vm2328, %v2323, %v1867
      %v2357 = vsel %vm2328, %v2324, %v1869
      %v2358 = vsel %vm2328, %v2325, %v1871
      %v2359 = vsel %vm2328, %v2326, %v1873
      %v2360 = vsel %vm2328, %v2327, %v1875
      %vm2361 = vcmask 457728
      %v2362 = vsel %vm2361, %v2329, %v1941
      %v2363 = vsel %vm2361, %v2330, %v1943
      %v2364 = vsel %vm2361, %v2331, %v1945
      %v2365 = vsel %vm2361, %v2332, %v1947
      %v2366 = vsel %vm2361, %v2333, %v1949
      %v2367 = vsel %vm2361, %v2334, %v1951
      %v2368 = vsel %vm2361, %v2335, %v1953
      %v2369 = vsel %vm2361, %v2336, %v1955
      %v2370 = vsel %vm2361, %v2337, %v1957
      %v2371 = vsel %vm2361, %v2338, %v1959
      %v2372 = vsel %vm2361, %v2339, %v1961
      %v2373 = vsel %vm2361, %v2340, %v1963
      %v2374 = vsel %vm2361, %v2341, %v1965
      %v2375 = vsel %vm2361, %v2342, %v1967
      %v2376 = vsel %vm2361, %v2343, %v1969
      %v2377 = vsel %vm2361, %v2344, %v1971
      %v2378 = vsel %vm2361, %v2345, %v1973
      %v2379 = vsel %vm2361, %v2346, %v1975
      %v2380 = vsel %vm2361, %v2347, %v1977
      %v2381 = vsel %vm2361, %v2348, %v1979
      %v2382 = vsel %vm2361, %v2349, %v1981
      %v2383 = vsel %vm2361, %v2350, %v1983
      %v2384 = vsel %vm2361, %v2351, %v1985
      %v2385 = vsel %vm2361, %v2352, %v1987
      %v2386 = vsel %vm2361, %v2353, %v1989
      %v2387 = vsel %vm2361, %v2354, %v1991
      %v2388 = vsel %vm2361, %v2355, %v1993
      %v2389 = vsel %vm2361, %v2356, %v1995
      %v2390 = vsel %vm2361, %v2357, %v1997
      %v2391 = vsel %vm2361, %v2358, %v1999
      %v2392 = vsel %vm2361, %v2359, %v2001
      %v2393 = vsel %vm2361, %v2360, %v2003
      %vm2394 = vcmask 523264
      %v2395 = vsel %vm2394, %v2362, %v2069
      %v2396 = vsel %vm2394, %v2363, %v2071
      %v2397 = vsel %vm2394, %v2364, %v2073
      %v2398 = vsel %vm2394, %v2365, %v2075
      %v2399 = vsel %vm2394, %v2366, %v2077
      %v2400 = vsel %vm2394, %v2367, %v2079
      %v2401 = vsel %vm2394, %v2368, %v2081
      %v2402 = vsel %vm2394, %v2369, %v2083
      %v2403 = vsel %vm2394, %v2370, %v2085
      %v2404 = vsel %vm2394, %v2371, %v2087
      %v2405 = vsel %vm2394, %v2372, %v2089
      %v2406 = vsel %vm2394, %v2373, %v2091
      %v2407 = vsel %vm2394, %v2374, %v2093
      %v2408 = vsel %vm2394, %v2375, %v2095
      %v2409 = vsel %vm2394, %v2376, %v2097
      %v2410 = vsel %vm2394, %v2377, %v2099
      %v2411 = vsel %vm2394, %v2378, %v2101
      %v2412 = vsel %vm2394, %v2379, %v2103
      %v2413 = vsel %vm2394, %v2380, %v2105
      %v2414 = vsel %vm2394, %v2381, %v2107
      %v2415 = vsel %vm2394, %v2382, %v2109
      %v2416 = vsel %vm2394, %v2383, %v2111
      %v2417 = vsel %vm2394, %v2384, %v2113
      %v2418 = vsel %vm2394, %v2385, %v2115
      %v2419 = vsel %vm2394, %v2386, %v2117
      %v2420 = vsel %vm2394, %v2387, %v2119
      %v2421 = vsel %vm2394, %v2388, %v2121
      %v2422 = vsel %vm2394, %v2389, %v2123
      %v2423 = vsel %vm2394, %v2390, %v2125
      %v2424 = vsel %vm2394, %v2391, %v2127
      %v2425 = vsel %vm2394, %v2392, %v2129
      %v2426 = vsel %vm2394, %v2393, %v2131
      %v2427 = vpack.c.bf16 %v2396, %v2395
      %v2428 = vpack.c.bf16 %v2398, %v2397
      %v2429 = vpack.c.bf16 %v2400, %v2399
      %v2430 = vpack.c.bf16 %v2402, %v2401
      %v2431 = vpack.c.bf16 %v2404, %v2403
      %v2432 = vpack.c.bf16 %v2406, %v2405
      %v2433 = vpack.c.bf16 %v2408, %v2407
      %v2434 = vpack.c.bf16 %v2410, %v2409
      %v2435 = vpack.c.bf16 %v2412, %v2411
      %v2436 = vpack.c.bf16 %v2414, %v2413
      %v2437 = vpack.c.bf16 %v2416, %v2415
      %v2438 = vpack.c.bf16 %v2418, %v2417
      %v2439 = vpack.c.bf16 %v2420, %v2419
      %v2440 = vpack.c.bf16 %v2422, %v2421
      %v2441 = vpack.c.bf16 %v2424, %v2423
      %v2442 = vpack.c.bf16 %v2426, %v2425
      %v2443 = vld [vmem:[%s6] sm:$0xf]
      %v2444 = vld [vmem:[%s6 + $0x4] sm:$0xf]
      %v2445 = vld [vmem:[%s6 + $0x8] sm:$0xf]
      %v2446 = vld [vmem:[%s6 + $0xc] sm:$0xf]
      %v2447 = vld [vmem:[%s6 + $0x10] sm:$0xf]
      %v2448 = vld [vmem:[%s6 + $0x14] sm:$0xf]
      %v2449 = vld [vmem:[%s6 + $0x18] sm:$0xf]
      %v2450 = vld [vmem:[%s6 + $0x1c] sm:$0xf]
      %v2451 = vld [vmem:[%s6 + $0x20] sm:$0xf]
      %v2461 = vunpack.c.l.b16 %v2443
      %v2462 = vunpack.c.l.b16 %v2444
      %v2463 = vunpack.c.l.b16 %v2445
      %v2464 = vunpack.c.l.b16 %v2446
      %v2465 = vunpack.c.l.b16 %v2447
      %v2466 = vunpack.c.l.b16 %v2448
      %v2467 = vunpack.c.l.b16 %v2449
      %v2468 = vunpack.c.l.b16 %v2450
      %v2469 = vunpack.c.l.b16 %v2451
      %v2470 = vpack.c.b16 %v2462, %v2461
      %v2471 = vpack.c.b16 %v2464, %v2463
      %v2472 = vpack.c.b16 %v2466, %v2465
      %v2473 = vpack.c.b16 %v2468, %v2467
      %v2474 = vpack.c.b16 %v2469, %v2469
      %vm2479 = vcmask 588800
      %v2481 = vsel %vm2479, %v2427, 0
      %v2484 = vsel %vm2479, %v2428, 0
      %v2487 = vsel %vm2479, %v2429, 0
      %v2490 = vsel %vm2479, %v2430, 0
      %v2493 = vsel %vm2479, %v2431, 0
      %v2496 = vsel %vm2479, %v2432, 0
      %v2499 = vsel %vm2479, %v2433, 0
      %v2502 = vsel %vm2479, %v2434, 0
      %v2505 = vsel %vm2479, %v2435, 0
      %v2508 = vsel %vm2479, %v2436, 0
      %v2511 = vsel %vm2479, %v2437, 0
      %v2514 = vsel %vm2479, %v2438, 0
      %v2517 = vsel %vm2479, %v2439, 0
      %v2520 = vsel %vm2479, %v2440, 0
      %v2523 = vsel %vm2479, %v2441, 0
      %v2526 = vsel %vm2479, %v2442, 0
      %v2529 = vsel %vm488, %v2474, 0
      %2531 = vmatprep.subr.bf16.mxu0 0
      %2532 = vmatpush1.bf16.msra.mxu0 %v2470
      %2533 = vmatprep.subr.bf16.mxu0 0
      %2534 = vmatpush1.bf16.msra.mxu0 %v2471
      %2535 = vmatprep.subr.bf16.mxu0 0
      %2536 = vmatpush1.bf16.msra.mxu0 %v2472
      %2537 = vmatprep.subr.bf16.mxu0 0
      %2538 = vmatpush1.bf16.msra.mxu0 %v2473
      %2539 = vmatprep.subr.bf16.mxu0 0
      %2540 = vmatpush1.bf16.msra.mxu0 %v2529
      %2541 = vmatprep.subr.bf16.mxu0 0
      %2542 = vmatpush1.bf16.msra.mxu0 0
      %2543 = vmatprep.subr.bf16.mxu0 0
      %2544 = vmatpush1.bf16.msra.mxu0 0
      %2545 = vmatprep.subr.bf16.mxu0 0
      %2546 = vmatpush1.bf16.msra.mxu0 0
      %2547 = vmatprep.subr.bf16.mxu0 0
      %2548 = vmatpush1.bf16.msra.mxu0 0
      %2549 = vmatprep.subr.bf16.mxu0 0
      %2550 = vmatpush1.bf16.msra.mxu0 0
      %2551 = vmatprep.subr.bf16.mxu0 0
      %2552 = vmatpush1.bf16.msra.mxu0 0
      %2553 = vmatprep.subr.bf16.mxu0 0
      %2554 = vmatpush1.bf16.msra.mxu0 0
      %2555 = vmatprep.subr.bf16.mxu0 0
      %2556 = vmatpush1.bf16.msra.mxu0 0
      %2557 = vmatprep.subr.bf16.mxu0 0
      %2558 = vmatpush1.bf16.msra.mxu0 0
      %2559 = vmatprep.subr.bf16.mxu0 0
      %2560 = vmatpush1.bf16.msra.mxu0 0
      %2561 = vmatprep.subr.bf16.mxu0 0
      %2562 = vmatpush1.bf16.msra.mxu0 0
      %2563 = vmatprep.mubr.bf16.mxu0 0
      %2564 = vmatmul.mubr.bf16.gmra.mrb[0].mxu0 %v2481
      %v2565 = vpop.f32.mrb[0].mxu0
      %v2566 = vadd.f32 0.0, %v2565
      %v2567 = vpop.f32.mrb[0].mxu0
      %v2568 = vpop.f32.mrb[0].mxu0
      %v2569 = vadd.f32 0.0, %v2568
      %v2570 = vpop.f32.mrb[0].mxu0
      %2571 = vmatprep.mubr.bf16.mxu0 0
      %2572 = vmatmul.mubr.bf16.gmra.mrb[0].mxu0 %v2484
      %v2573 = vpop.f32.mrb[0].mxu0
      %v2574 = vadd.f32 0.0, %v2573
      %v2575 = vpop.f32.mrb[0].mxu0
      %v2576 = vpop.f32.mrb[0].mxu0
      %v2577 = vadd.f32 0.0, %v2576
      %v2578 = vpop.f32.mrb[0].mxu0
      %2579 = vmatprep.mubr.bf16.mxu0 0
      %2580 = vmatmul.mubr.bf16.gmra.mrb[0].mxu0 %v2487
      %v2581 = vpop.f32.mrb[0].mxu0
      %v2582 = vadd.f32 0.0, %v2581
      %v2583 = vpop.f32.mrb[0].mxu0
      %v2584 = vpop.f32.mrb[0].mxu0
      %v2585 = vadd.f32 0.0, %v2584
      %v2586 = vpop.f32.mrb[0].mxu0
      %2587 = vmatprep.mubr.bf16.mxu0 0
      %2588 = vmatmul.mubr.bf16.gmra.mrb[0].mxu0 %v2490
      %v2589 = vpop.f32.mrb[0].mxu0
      %v2590 = vadd.f32 0.0, %v2589
      %v2591 = vpop.f32.mrb[0].mxu0
      %v2592 = vpop.f32.mrb[0].mxu0
      %v2593 = vadd.f32 0.0, %v2592
      %v2594 = vpop.f32.mrb[0].mxu0
      %2595 = vmatprep.mubr.bf16.mxu0 0
      %2596 = vmatmul.mubr.bf16.gmra.mrb[0].mxu0 %v2493
      %v2597 = vpop.f32.mrb[0].mxu0
      %v2598 = vadd.f32 0.0, %v2597
      %v2599 = vpop.f32.mrb[0].mxu0
      %v2600 = vpop.f32.mrb[0].mxu0
      %v2601 = vadd.f32 0.0, %v2600
      %v2602 = vpop.f32.mrb[0].mxu0
      %2603 = vmatprep.mubr.bf16.mxu0 0
      %2604 = vmatmul.mubr.bf16.gmra.mrb[0].mxu0 %v2496
      %v2605 = vpop.f32.mrb[0].mxu0
      %v2606 = vadd.f32 0.0, %v2605
      %v2607 = vpop.f32.mrb[0].mxu0
      %v2608 = vpop.f32.mrb[0].mxu0
      %v2609 = vadd.f32 0.0, %v2608
      %v2610 = vpop.f32.mrb[0].mxu0
      %2611 = vmatprep.mubr.bf16.mxu0 0
      %2612 = vmatmul.mubr.bf16.gmra.mrb[0].mxu0 %v2499
      %v2613 = vpop.f32.mrb[0].mxu0
      %v2614 = vadd.f32 0.0, %v2613
      %v2615 = vpop.f32.mrb[0].mxu0
      %v2616 = vpop.f32.mrb[0].mxu0
      %v2617 = vadd.f32 0.0, %v2616
      %v2618 = vpop.f32.mrb[0].mxu0
      %2619 = vmatprep.mubr.bf16.mxu0 0
      %2620 = vmatmul.mubr.bf16.gmra.mrb[0].mxu0 %v2502
      %v2621 = vpop.f32.mrb[0].mxu0
      %v2622 = vadd.f32 0.0, %v2621
      %v2623 = vpop.f32.mrb[0].mxu0
      %v2624 = vpop.f32.mrb[0].mxu0
      %v2625 = vadd.f32 0.0, %v2624
      %v2626 = vpop.f32.mrb[0].mxu0
      %2627 = vmatprep.mubr.bf16.mxu0 0
      %2628 = vmatmul.mubr.bf16.gmra.mrb[0].mxu0 %v2505
      %v2629 = vpop.f32.mrb[0].mxu0
      %v2630 = vadd.f32 0.0, %v2629
      %v2631 = vpop.f32.mrb[0].mxu0
      %v2632 = vpop.f32.mrb[0].mxu0
      %v2633 = vadd.f32 0.0, %v2632
      %v2634 = vpop.f32.mrb[0].mxu0
      %2635 = vmatprep.mubr.bf16.mxu0 0
      %2636 = vmatmul.mubr.bf16.gmra.mrb[0].mxu0 %v2508
      %v2637 = vpop.f32.mrb[0].mxu0
      %v2638 = vadd.f32 0.0, %v2637
      %v2639 = vpop.f32.mrb[0].mxu0
      %v2640 = vpop.f32.mrb[0].mxu0
      %v2641 = vadd.f32 0.0, %v2640
      %v2642 = vpop.f32.mrb[0].mxu0
      %2643 = vmatprep.mubr.bf16.mxu0 0
      %2644 = vmatmul.mubr.bf16.gmra.mrb[0].mxu0 %v2511
      %v2645 = vpop.f32.mrb[0].mxu0
      %v2646 = vadd.f32 0.0, %v2645
      %v2647 = vpop.f32.mrb[0].mxu0
      %v2648 = vpop.f32.mrb[0].mxu0
      %v2649 = vadd.f32 0.0, %v2648
      %v2650 = vpop.f32.mrb[0].mxu0
      %2651 = vmatprep.mubr.bf16.mxu0 0
      %2652 = vmatmul.mubr.bf16.gmra.mrb[0].mxu0 %v2514
      %v2653 = vpop.f32.mrb[0].mxu0
      %v2654 = vadd.f32 0.0, %v2653
      %v2655 = vpop.f32.mrb[0].mxu0
      %v2656 = vpop.f32.mrb[0].mxu0
      %v2657 = vadd.f32 0.0, %v2656
      %v2658 = vpop.f32.mrb[0].mxu0
      %2659 = vmatprep.mubr.bf16.mxu0 0
      %2660 = vmatmul.mubr.bf16.gmra.mrb[0].mxu0 %v2517
      %v2661 = vpop.f32.mrb[0].mxu0
      %v2662 = vadd.f32 0.0, %v2661
      %v2663 = vpop.f32.mrb[0].mxu0
      %v2664 = vpop.f32.mrb[0].mxu0
      %v2665 = vadd.f32 0.0, %v2664
      %v2666 = vpop.f32.mrb[0].mxu0
      %2667 = vmatprep.mubr.bf16.mxu0 0
      %2668 = vmatmul.mubr.bf16.gmra.mrb[0].mxu0 %v2520
      %v2669 = vpop.f32.mrb[0].mxu0
      %v2670 = vadd.f32 0.0, %v2669
      %v2671 = vpop.f32.mrb[0].mxu0
      %v2672 = vpop.f32.mrb[0].mxu0
      %v2673 = vadd.f32 0.0, %v2672
      %v2674 = vpop.f32.mrb[0].mxu0
      %2675 = vmatprep.mubr.bf16.mxu0 0
      %2676 = vmatmul.mubr.bf16.gmra.mrb[0].mxu0 %v2523
      %v2677 = vpop.f32.mrb[0].mxu0
      %v2678 = vadd.f32 0.0, %v2677
      %v2679 = vpop.f32.mrb[0].mxu0
      %v2680 = vpop.f32.mrb[0].mxu0
      %v2681 = vadd.f32 0.0, %v2680
      %v2682 = vpop.f32.mrb[0].mxu0
      %2683 = vmatprep.mubr.bf16.mxu0 0
      %2684 = vmatmul.mubr.bf16.gmra.mrb[0].mxu0 %v2526
      %v2685 = vpop.f32.mrb[0].mxu0
      %v2686 = vadd.f32 0.0, %v2685
      %v2687 = vpop.f32.mrb[0].mxu0
      %v2688 = vpop.f32.mrb[0].mxu0
      %v2689 = vadd.f32 0.0, %v2688
      %v2690 = vpop.f32.mrb[0].mxu0
      %2691 = vdwg.mxu0
      %vm2692 = vcmask 31744
      %2693 = vst.msk [vmem:[%s278] sm:$0xff] %vm2692, %v2566
      %2694 = vst.msk [vmem:[%s278 + $0x8] sm:$0xff] %vm2692, %v2569
      %2695 = vst.msk [vmem:[%s278 + $0x10] sm:$0xff] %vm2692, %v2574
      %2696 = vst.msk [vmem:[%s278 + $0x18] sm:$0xff] %vm2692, %v2577
      %2697 = vst.msk [vmem:[%s278 + $0x20] sm:$0xff] %vm2692, %v2582
      %2698 = vst.msk [vmem:[%s278 + $0x28] sm:$0xff] %vm2692, %v2585
      %2699 = vst.msk [vmem:[%s278 + $0x30] sm:$0xff] %vm2692, %v2590
      %2700 = vst.msk [vmem:[%s278 + $0x38] sm:$0xff] %vm2692, %v2593
      %2701 = vst.msk [vmem:[%s278 + $0x40] sm:$0xff] %vm2692, %v2598
      %2702 = vst.msk [vmem:[%s278 + $0x48] sm:$0xff] %vm2692, %v2601
      %2703 = vst.msk [vmem:[%s278 + $0x50] sm:$0xff] %vm2692, %v2606
      %2704 = vst.msk [vmem:[%s278 + $0x58] sm:$0xff] %vm2692, %v2609
      %2705 = vst.msk [vmem:[%s278 + $0x60] sm:$0xff] %vm2692, %v2614
      %2706 = vst.msk [vmem:[%s278 + $0x68] sm:$0xff] %vm2692, %v2617
      %2707 = vst.msk [vmem:[%s278 + $0x70] sm:$0xff] %vm2692, %v2622
      %2708 = vst.msk [vmem:[%s278 + $0x78] sm:$0xff] %vm2692, %v2625
      %2709 = vst.msk [vmem:[%s278 + $0x80] sm:$0xff] %vm2692, %v2630
      %2710 = vst.msk [vmem:[%s278 + $0x88] sm:$0xff] %vm2692, %v2633
      %2711 = vst.msk [vmem:[%s278 + $0x90] sm:$0xff] %vm2692, %v2638
      %2712 = vst.msk [vmem:[%s278 + $0x98] sm:$0xff] %vm2692, %v2641
      %2713 = vst.msk [vmem:[%s278 + $0xa0] sm:$0xff] %vm2692, %v2646
      %2714 = vst.msk [vmem:[%s278 + $0xa8] sm:$0xff] %vm2692, %v2649
      %2715 = vst.msk [vmem:[%s278 + $0xb0] sm:$0xff] %vm2692, %v2654
      %2716 = vst.msk [vmem:[%s278 + $0xb8] sm:$0xff] %vm2692, %v2657
      %2717 = vst.msk [vmem:[%s278 + $0xc0] sm:$0xff] %vm2692, %v2662
      %2718 = vst.msk [vmem:[%s278 + $0xc8] sm:$0xff] %vm2692, %v2665
      %2719 = vst.msk [vmem:[%s278 + $0xd0] sm:$0xff] %vm2692, %v2670
      %2720 = vst.msk [vmem:[%s278 + $0xd8] sm:$0xff] %vm2692, %v2673
      %2721 = vst.msk [vmem:[%s278 + $0xe0] sm:$0xff] %vm2692, %v2678
      %2722 = vst.msk [vmem:[%s278 + $0xe8] sm:$0xff] %vm2692, %v2681
      %2723 = vst.msk [vmem:[%s278 + $0xf0] sm:$0xff] %vm2692, %v2686
      %2724 = vst.msk [vmem:[%s278 + $0xf8] sm:$0xff] %vm2692, %v2689
      %p2725 = scmp.lt.s32.totalorder %s18, 1
      %s2726 = scalar_select %p2725, %s18, 1
      %s2727 = smul.addr %s2726, 32
      %s2728 = smul.addr %s2727, 8
      %s2729 = scalar_lea.vmem %s7, %s2728
      // Predicated region
      $region49: #{tpu_custom_call.1} parent=47 // pred_check
        %p2730 = pneg %p188
      $region50: #{tpu_custom_call.1} parent=47 // pred_check_branch
        %2732 = sbr.rel (%p2730) target = $region52
      $region51: #{tpu_custom_call.1} parent=47 // pred_region
        _
      $region52: #{tpu_custom_call.1} parent=47 // pred_fallthru
        _
    $region48: #{tpu_custom_call.1} parent=5 // pred_fallthru
      _
    %p2733 = scmp.le.s32.totalorder 2, %s13
    // Predicated region
    $region53: #{tpu_custom_call.1} parent=5 // pred_check
      %p2734 = pneg %p2733
    $region54: #{tpu_custom_call.1} parent=5 // pred_check_branch
      %2736 = sbr.rel (%p2734) target = $region56
    $region55: #{tpu_custom_call.1} parent=5 // pred_region
      %s2737 = ssub.s32 %s13, 2
      // Predicated region
      $region57: #{tpu_custom_call.1} parent=55 // pred_check
        %p2738 = pneg %p194
      $region58: #{tpu_custom_call.1} parent=55 // pred_check_branch
        %2740 = sbr.rel (%p2738) target = $region60
      $region59: #{tpu_custom_call.1} parent=55 // pred_region
        %p2741 = scmp.lt.s32.totalorder %s19, 1
        %s2742 = scalar_select %p2741, %s19, 1
        %s2743 = smul.addr %s2742, 32
        %s2744 = smul.addr %s2743, 8
        %s2745 = scalar_lea.vmem %s7, %s2744
      $region60: #{tpu_custom_call.1} parent=55 // pred_fallthru
        _
    $region56: #{tpu_custom_call.1} parent=5 // pred_fallthru
      _
  $region6: #{tpu_custom_call.1} parent=0 // loop_footer
    %s17 = sadd.s32 1, %s13
  $region7: #{tpu_custom_call.1} parent=0 // loop_footer_branch
    %12 = sbr.rel target = $region3
  $region8: #{tpu_custom_call.1} parent=0 // loop_exit
    _

</llo_original>
